<compile_context>
chip_gen: v5e
topology: v5e:2x2
jax: 0.10.0
libtpu: 0.0.40
codegen_flags: <defaults>
</compile_context>

<pallas_src>
import jax
import jax.numpy as jnp
from jax.experimental import pallas as pl
from jax.experimental.pallas import tpu as pltpu


def _round_up(x, m):
    return ((x + m - 1) // m) * m


def _num_tensorcores() -> int:
    """Best-effort TensorCores-per-chip (v7x has 2). Defaults to 1."""
    try:
        info = pltpu.get_tpu_info()
        for attr in ("num_cores", "tensorcores_per_chip", "core_count"):
            n = getattr(info, attr, None)
            if isinstance(n, int) and 1 <= n <= 8:
                return n
    except Exception:
        pass
    try:
        d = jax.devices()[0]
        for attr in ("num_cores", "core_count"):
            n = getattr(d, attr, None)
            if isinstance(n, int) and 1 <= n <= 8:
                return n
    except Exception:
        pass
    return 1


def fused_conv_hswishlike_pool_kernel(x_ref, w_ref, o_ref):
    """x_ref: (4, K, TM) -- 4 maxpool-corner streams; K = Cin + 1 (ones row
                            folds the bias); pooled pixels along lanes.
       w_ref: (Cout, K)  -- [W | b], resident across the grid.
       o_ref: (Cout, TM).
    """
    w = w_ref[...]
    # Four dense (Cout, K) x (K, TM) MXU matmuls -- one per pool corner.
    v0 = jnp.dot(w, x_ref[0], preferred_element_type=jnp.float32)
    v1 = jnp.dot(w, x_ref[1], preferred_element_type=jnp.float32)
    v2 = jnp.dot(w, x_ref[2], preferred_element_type=jnp.float32)
    v3 = jnp.dot(w, x_ref[3], preferred_element_type=jnp.float32)
    # MaxPool2d(2,2) == max over the 4 corner streams; activation is monotone
    # non-decreasing, so max-then-activate == activate-then-max (exact).
    m = jnp.maximum(jnp.maximum(v0, v1), jnp.maximum(v2, v3))
    # clamp_min(0) -> clamp_max(6) -> *v1 -> /6  (multiply by constant 1/6)
    o_ref[...] = m * jnp.clip(m, 0.0, 6.0) * (1.0 / 6.0)


@jax.jit
def model_forward(x_nchw, w_oihw, bias):
    N, Cin, H, W = x_nchw.shape
    Cout = w_oihw.shape[0]
    # conv: kernel=1, stride=1, padding=1 -> spatial (H+2, W+2)
    Hp, Wp = H + 2, W + 2
    # maxpool kernel=2, stride=2, padding=0
    Ho, Wo = Hp // 2, Wp // 2
    M = N * Ho * Wo                 # pooled pixel count
    K = Cin + 1                     # +1 ones row folds the bias

    # Tile selection: the kernel is overhead-bound (~0.35 us per grid step),
    # so use the fewest steps: 1 step on 1-TC chips (v5e/v6e), one step per
    # TensorCore on multi-TC chips (v7x).  Lane dim stays a multiple of 128.
    nc = _num_tensorcores()
    tm = _round_up(pl.cdiv(M, nc), 128)
    M_pad = _round_up(M, tm)
    grid_m = M_pad // tm

    # --- corner-stream input (4, K, M_pad) --------------------------------
    x = x_nchw.astype(jnp.float32)
    # zero-pad spatially by 1 (conv padding=1); crop to pooled coverage
    x = jnp.pad(x, ((0, 0), (0, 0), (1, 1), (1, 1)))[:, :, :2 * Ho, :2 * Wo]
    # (N, C, Ho, 2, Wo, 2) -> (di, dj, C, N, Ho, Wo) -> (4, C, M)
    x = x.reshape(N, Cin, Ho, 2, Wo, 2)
    x = jnp.transpose(x, (3, 5, 1, 0, 2, 4)).reshape(4, Cin, M)
    # ones row per stream (bias folding); pad M (pad cols give 0, cropped)
    x = jnp.concatenate([x, jnp.ones((4, 1, M), jnp.float32)], axis=1)
    x = jnp.pad(x, ((0, 0), (0, 0), (0, M_pad - M)))

    # --- stacked weight [W | b] : (Cout, K) --------------------------------
    wb = jnp.concatenate(
        [w_oihw.reshape(Cout, Cin).astype(jnp.float32),
         bias.reshape(Cout, 1).astype(jnp.float32)], axis=1)

    out = pl.pallas_call(
        fused_conv_hswishlike_pool_kernel,
        out_shape=jax.ShapeDtypeStruct((Cout, M_pad), jnp.float32),
        grid_spec=pltpu.PrefetchScalarGridSpec(
            num_scalar_prefetch=0,
            grid=(grid_m,),
            in_specs=[
                pl.BlockSpec((4, K, tm), lambda i: (0, 0, i)),
                pl.BlockSpec((Cout, K), lambda i: (0, 0)),   # resident weight
            ],
            out_specs=pl.BlockSpec((Cout, tm), lambda i: (0, i)),
        ),
        compiler_params=pltpu.CompilerParams(
            dimension_semantics=("parallel",)),
    )(x, wb)

    out = out[:, :M].reshape(Cout, N, Ho, Wo)
    return jnp.transpose(out, (1, 0, 2, 3))       # back to NCHW


def reference(x_nchw, w_oihw, bias):
    """Pure-JAX reference (literal op order of the PyTorch module)."""
    N, Cin, H, W = x_nchw.shape
    Cout = w_oihw.shape[0]
    x = jnp.transpose(x_nchw, (0, 2, 3, 1)).astype(jnp.float32)
    x = jnp.pad(x, ((0, 0), (1, 1), (1, 1), (0, 0)))
    v1 = jnp.einsum('nhwc,oc->nhwo', x, w_oihw.reshape(Cout, Cin)) + bias
    v3 = jnp.clip(v1, 0.0, 6.0)
    v5 = v1 * v3 / 6.0
    Hp, Wp = H + 2, W + 2
    Ho, Wo = Hp // 2, Wp // 2
    v5 = v5[:, :2 * Ho, :2 * Wo, :].reshape(N, Ho, 2, Wo, 2, Cout)
    pooled = jnp.max(v5, axis=(2, 4))
    return jnp.transpose(pooled, (0, 3, 1, 2))


if __name__ == "__main__":
    key = jax.random.PRNGKey(0)
    kx, kw, kb = jax.random.split(key, 3)

    # shapes of the original spec: x1 = torch.randn(1, 3, 64, 64)
    N, Cin, H, W = 1, 3, 64, 64
    Cout = 64

    x = jax.random.normal(kx, (N, Cin, H, W), dtype=jnp.float32)
    w = jax.random.normal(kw, (Cout, Cin, 1, 1), dtype=jnp.float32) * 0.5
    b = jax.random.normal(kb, (Cout,), dtype=jnp.float32) * 0.1

    out = jax.block_until_ready(model_forward(x, w, b))
    ref = reference(x, w, b)

    assert out.shape == (N, Cout, (H + 2) // 2, (W + 2) // 2), out.shape
    max_err = float(jnp.max(jnp.abs(out - ref)))
    assert jnp.allclose(out, ref, atol=1e-3, rtol=1e-3), max_err

    print("KERNEL_OK")
</pallas_src>

<mosaic_0001>
module attributes {stable_mosaic.version = 11 : i64} {
  func.func @fused_conv_hswishlike_pool_kernel(%arg0: i32, %arg1: memref<4x4x1152xf32, #tpu.memory_space<vmem>>, %arg2: memref<64x4xf32, #tpu.memory_space<vmem>>, %arg3: memref<64x1152xf32, #tpu.memory_space<vmem>>) attributes {dimension_semantics = [#tpu.dimension_semantics<parallel>], iteration_bounds = array<i64: 1>, scalar_prefetch = 0 : i64, scratch_operands = 0 : i64, tpu.core_type = #tpu.core_type<tc>, window_params = [{transform_indices = @transform_0, window_bounds = array<i64: 4, 4, 1152>}, {pipeline_mode = #tpu.pipeline_mode<synchronous>, transform_indices = @transform_1, window_bounds = array<i64: 64, 4>}, {transform_indices = @transform_2, window_bounds = array<i64: 64, 1152>}]} {
    %c0 = arith.constant 0 : index
    %c0_0 = arith.constant 0 : index
    %0 = vector.load %arg2[%c0, %c0_0] : memref<64x4xf32, #tpu.memory_space<vmem>>, vector<64x4xf32>
    %c0_1 = arith.constant 0 : index
    %c0_2 = arith.constant 0 : index
    %c0_3 = arith.constant 0 : index
    %1 = vector.load %arg1[%c0_1, %c0_2, %c0_3] : memref<4x4x1152xf32, #tpu.memory_space<vmem>>, vector<1x4x1152xf32>
    %2 = vector.shape_cast %1 : vector<1x4x1152xf32> to vector<4x1152xf32>
    %cst = arith.constant dense<0.000000e+00> : vector<64x1152xf32>
    %3 = tpu.matmul %0, %2, %cst {dimension_numbers = #tpu.dot_dimension_numbers<[1], [0], [0], [1], [0, 0, 1, 1], [], []>} : vector<64x4xf32>, vector<4x1152xf32>, vector<64x1152xf32> -> vector<64x1152xf32>
    %c1 = arith.constant 1 : index
    %c0_4 = arith.constant 0 : index
    %c0_5 = arith.constant 0 : index
    %4 = vector.load %arg1[%c1, %c0_4, %c0_5] : memref<4x4x1152xf32, #tpu.memory_space<vmem>>, vector<1x4x1152xf32>
    %5 = vector.shape_cast %4 : vector<1x4x1152xf32> to vector<4x1152xf32>
    %cst_6 = arith.constant dense<0.000000e+00> : vector<64x1152xf32>
    %6 = tpu.matmul %0, %5, %cst_6 {dimension_numbers = #tpu.dot_dimension_numbers<[1], [0], [0], [1], [0, 0, 1, 1], [], []>} : vector<64x4xf32>, vector<4x1152xf32>, vector<64x1152xf32> -> vector<64x1152xf32>
    %c2 = arith.constant 2 : index
    %c0_7 = arith.constant 0 : index
    %c0_8 = arith.constant 0 : index
    %7 = vector.load %arg1[%c2, %c0_7, %c0_8] : memref<4x4x1152xf32, #tpu.memory_space<vmem>>, vector<1x4x1152xf32>
    %8 = vector.shape_cast %7 : vector<1x4x1152xf32> to vector<4x1152xf32>
    %cst_9 = arith.constant dense<0.000000e+00> : vector<64x1152xf32>
    %9 = tpu.matmul %0, %8, %cst_9 {dimension_numbers = #tpu.dot_dimension_numbers<[1], [0], [0], [1], [0, 0, 1, 1], [], []>} : vector<64x4xf32>, vector<4x1152xf32>, vector<64x1152xf32> -> vector<64x1152xf32>
    %c3 = arith.constant 3 : index
    %c0_10 = arith.constant 0 : index
    %c0_11 = arith.constant 0 : index
    %10 = vector.load %arg1[%c3, %c0_10, %c0_11] : memref<4x4x1152xf32, #tpu.memory_space<vmem>>, vector<1x4x1152xf32>
    %11 = vector.shape_cast %10 : vector<1x4x1152xf32> to vector<4x1152xf32>
    %cst_12 = arith.constant dense<0.000000e+00> : vector<64x1152xf32>
    %12 = tpu.matmul %0, %11, %cst_12 {dimension_numbers = #tpu.dot_dimension_numbers<[1], [0], [0], [1], [0, 0, 1, 1], [], []>} : vector<64x4xf32>, vector<4x1152xf32>, vector<64x1152xf32> -> vector<64x1152xf32>
    %13 = arith.maximumf %3, %6 : vector<64x1152xf32>
    %14 = arith.maximumf %9, %12 : vector<64x1152xf32>
    %15 = arith.maximumf %13, %14 : vector<64x1152xf32>
    %cst_13 = arith.constant 0.000000e+00 : f32
    %cst_14 = arith.constant 6.000000e+00 : f32
    %16 = vector.broadcast %cst_13 : f32 to vector<64x1152xf32>
    %17 = arith.maximumf %16, %15 : vector<64x1152xf32>
    %18 = vector.broadcast %cst_14 : f32 to vector<64x1152xf32>
    %19 = arith.minimumf %18, %17 : vector<64x1152xf32>
    %20 = arith.mulf %15, %19 : vector<64x1152xf32>
    %cst_15 = arith.constant 0.166666672 : f32
    %21 = vector.broadcast %cst_15 : f32 to vector<64x1152xf32>
    %22 = arith.mulf %20, %21 : vector<64x1152xf32>
    %c0_16 = arith.constant 0 : index
    %c0_17 = arith.constant 0 : index
    %23 = vector.load %arg3[%c0_16, %c0_17] : memref<64x1152xf32, #tpu.memory_space<vmem>>, vector<64x1152xf32>
    tpu.vector_store %arg3[%c0_16, %c0_17], %22 {strides = array<i32>} : memref<64x1152xf32, #tpu.memory_space<vmem>>, vector<64x1152xf32>,
    return
  }
  func.func @transform_0(%arg0: i32) -> (i32, i32, i32) {
    %c0_i32 = arith.constant 0 : i32
    %c0_i32_0 = arith.constant 0 : i32
    %c0_i32_1 = arith.constant 0 : i32
    return %c0_i32, %c0_i32_0, %arg0 : i32, i32, i32
  }
  func.func @transform_1(%arg0: i32) -> (i32, i32) {
    %c0_i32 = arith.constant 0 : i32
    %c0_i32_0 = arith.constant 0 : i32
    %c0_i32_1 = arith.constant 0 : i32
    return %c0_i32, %c0_i32_0 : i32, i32
  }
  func.func @transform_2(%arg0: i32) -> (i32, i32) {
    %c0_i32 = arith.constant 0 : i32
    %c0_i32_0 = arith.constant 0 : i32
    return %c0_i32, %arg0 : i32, i32
  }
}

</mosaic_0001>

<llo_original>
// kernel: model_forward.1
$region0: #{model_forward.1}
  #allocation0 [shape = 'u32[]', space=smem, size = 0x4, offset = 0x4, fixed_abs, tag = 'smem constant byte address 0x4 - core index']
  #allocation1 [shape = 'u32[72,128]{1,0:T(1,128)}', space=vmem, size = 0x9000, scoped, tag = 'internal scratch']
  %s0 = inlined_call_operand.vmem [shape: f32[4,4,1152], index: 0, kind: input, shape index: {}]
  %s1 = inlined_call_operand.vmem [shape: f32[64,4], index: 1, kind: input, shape index: {}]
  %s2 = inlined_call_operand.vmem [shape: f32[64,1152], index: 2, kind: output, shape index: {}]
  %s3 = sld [smem:[#allocation0]]
  $region18: #{model_forward.1} parent=0
    _
  %s5 = ssub.s32 1, %s3
  %s6 = scalar_select 0, %s5, %s3
  // Predicated region
  $region2: #{model_forward.1} parent=0 // pred_check
    _
  $region3: #{model_forward.1} parent=0 // pred_check_branch
    %8 = sbr.rel (0) target = $region5
  $region4: #{model_forward.1} parent=0 // pred_region
    _
  $region5: #{model_forward.1} parent=0 // pred_fallthru
    _
  // Predicated region
  $region6: #{model_forward.1} parent=0 // pred_check
    _
  $region7: #{model_forward.1} parent=0 // pred_check_branch
    %10 = sbr.rel (0) target = $region9
  $region8: #{model_forward.1} parent=0 // pred_region
    _
  $region9: #{model_forward.1} parent=0 // pred_fallthru
    _
  %v11 = vld [vmem:[%s1] sm:$0xff]
  %v12 = vld [vmem:[%s1 + $0x8] sm:$0xff]
  %v13 = vld [vmem:[%s1 + $0x10] sm:$0xff]
  %v14 = vld [vmem:[%s1 + $0x18] sm:$0xff]
  %v15 = vld [vmem:[%s1 + $0x20] sm:$0xff]
  %v16 = vld [vmem:[%s1 + $0x28] sm:$0xff]
  %v17 = vld [vmem:[%s1 + $0x30] sm:$0xff]
  %v18 = vld [vmem:[%s1 + $0x38] sm:$0xff]
  %v19 = vld [vmem:[%s0] sm:$0xff]
  %v20 = vld [vmem:[%s0 + $0x8] sm:$0xff]
  %v21 = vld [vmem:[%s0 + $0x10] sm:$0xff]
  %v22 = vld [vmem:[%s0 + $0x18] sm:$0xff]
  %v23 = vld [vmem:[%s0 + $0x20] sm:$0xf]
  %29 = vst [vmem:[#allocation1] ss:$2 sm:$0xff] %v19
  %s30 = scalar_lea.vmem [#allocation1], 16
  %31 = vst [vmem:[%s30] ss:$2 sm:$0xff] %v20
  %s32 = scalar_lea.vmem [#allocation1], 32
  %33 = vst [vmem:[%s32] ss:$2 sm:$0xff] %v21
  %s34 = scalar_lea.vmem [#allocation1], 48
  %35 = vst [vmem:[%s34] ss:$2 sm:$0xff] %v22
  %v36 = vld.sshfl [vmem:[#allocation1] sm:$0xff pattern:$0x75316420]
  %v37 = vld.sshfl [vmem:[#allocation1 + $0x8] sm:$0xff pattern:$0x75316420]
  %v38 = vld.sshfl [vmem:[#allocation1 + $0x10] sm:$0xff pattern:$0x75316420]
  %v39 = vld.sshfl [vmem:[#allocation1 + $0x18] sm:$0xff pattern:$0x75316420]
  %v40 = vld.sshfl [vmem:[#allocation1 + $0x20] sm:$0xff pattern:$0x75316420]
  %v41 = vld.sshfl [vmem:[#allocation1 + $0x28] sm:$0xff pattern:$0x75316420]
  %v42 = vld.sshfl [vmem:[#allocation1 + $0x30] sm:$0xff pattern:$0x75316420]
  %v43 = vld.sshfl [vmem:[#allocation1 + $0x38] sm:$0xff pattern:$0x75316420]
  %44 = vst [vmem:[#allocation1] ss:$2 sm:$0xff] %v23
  %v45 = vld.sshfl [vmem:[#allocation1] sm:$0xff pattern:$0x75316420]
  %vm46 = vcmask 31744
  %v48 = vsel %vm46, %v11, 0
  %v51 = vsel %vm46, %v12, 0
  %v54 = vsel %vm46, %v13, 0
  %v57 = vsel %vm46, %v14, 0
  %v60 = vsel %vm46, %v15, 0
  %v63 = vsel %vm46, %v16, 0
  %v66 = vsel %vm46, %v17, 0
  %v69 = vsel %vm46, %v18, 0
  %vm71 = vcmask 1043456
  %v72 = vsel %vm71, %v36, 0
  %v74 = vsel %vm71, %v37, 0
  %v76 = vsel %vm71, %v38, 0
  %v78 = vsel %vm71, %v39, 0
  %v80 = vsel %vm71, %v40, 0
  %v82 = vsel %vm71, %v41, 0
  %v84 = vsel %vm71, %v42, 0
  %v86 = vsel %vm71, %v43, 0
  %v88 = vsel %vm71, %v45, 0
  %90 = vmatpush.msra.mxu0 0.0
  %91 = vmatpush.msra.mxu0 0.0
  %92 = vmatpush.msra.mxu0 0.0
  %93 = vmatpush.msra.mxu0 0.0
  %94 = vmatpush.msra.mxu0 0.0
  %95 = vmatpush.msra.mxu0 0.0
  %96 = vmatpush.msra.mxu0 0.0
  %97 = vmatpush.msra.mxu0 0.0
  %98 = vmatpush.msra.mxu0 0.0
  %99 = vmatpush.msra.mxu0 0.0
  %100 = vmatpush.msra.mxu0 0.0
  %101 = vmatpush.msra.mxu0 0.0
  %102 = vmatpush.msra.mxu0 0.0
  %103 = vmatpush.msra.mxu0 0.0
  %104 = vmatpush.msra.mxu0 0.0
  %105 = vmatpush.msra.mxu0 %v72
  %106 = vmatmul.f32.gmra.mxu0 %v48
  %v107 = vpop.f32.mrf.mxu0
  %v108 = vadd.f32 0.0, %v107
  %109 = vmatmul.f32.gmra.mxu0 %v51
  %v110 = vpop.f32.mrf.mxu0
  %v111 = vadd.f32 0.0, %v110
  %112 = vmatmul.f32.gmra.mxu0 %v54
  %v113 = vpop.f32.mrf.mxu0
  %v114 = vadd.f32 0.0, %v113
  %115 = vmatmul.f32.gmra.mxu0 %v57
  %v116 = vpop.f32.mrf.mxu0
  %v117 = vadd.f32 0.0, %v116
  %118 = vmatmul.f32.gmra.mxu0 %v60
  %v119 = vpop.f32.mrf.mxu0
  %v120 = vadd.f32 0.0, %v119
  %121 = vmatmul.f32.gmra.mxu0 %v63
  %v122 = vpop.f32.mrf.mxu0
  %v123 = vadd.f32 0.0, %v122
  %124 = vmatmul.f32.gmra.mxu0 %v66
  %v125 = vpop.f32.mrf.mxu0
  %v126 = vadd.f32 0.0, %v125
  %127 = vmatmul.f32.gmra.mxu0 %v69
  %v128 = vpop.f32.mrf.mxu0
  %v129 = vadd.f32 0.0, %v128
  %130 = vdwg.mxu0
  %131 = vmatpush.msra.mxu0 0.0
  %132 = vmatpush.msra.mxu0 0.0
  %133 = vmatpush.msra.mxu0 0.0
  %134 = vmatpush.msra.mxu0 0.0
  %135 = vmatpush.msra.mxu0 0.0
  %136 = vmatpush.msra.mxu0 0.0
  %137 = vmatpush.msra.mxu0 0.0
  %138 = vmatpush.msra.mxu0 0.0
  %139 = vmatpush.msra.mxu0 0.0
  %140 = vmatpush.msra.mxu0 0.0
  %141 = vmatpush.msra.mxu0 0.0
  %142 = vmatpush.msra.mxu0 0.0
  %143 = vmatpush.msra.mxu0 0.0
  %144 = vmatpush.msra.mxu0 0.0
  %145 = vmatpush.msra.mxu0 0.0
  %146 = vmatpush.msra.mxu0 %v74
  %147 = vmatmul.f32.gmra.mxu0 %v48
  %v148 = vpop.f32.mrf.mxu0
  %v149 = vadd.f32 0.0, %v148
  %150 = vmatmul.f32.gmra.mxu0 %v51
  %v151 = vpop.f32.mrf.mxu0
  %v152 = vadd.f32 0.0, %v151
  %153 = vmatmul.f32.gmra.mxu0 %v54
  %v154 = vpop.f32.mrf.mxu0
  %v155 = vadd.f32 0.0, %v154
  %156 = vmatmul.f32.gmra.mxu0 %v57
  %v157 = vpop.f32.mrf.mxu0
  %v158 = vadd.f32 0.0, %v157
  %159 = vmatmul.f32.gmra.mxu0 %v60
  %v160 = vpop.f32.mrf.mxu0
  %v161 = vadd.f32 0.0, %v160
  %162 = vmatmul.f32.gmra.mxu0 %v63
  %v163 = vpop.f32.mrf.mxu0
  %v164 = vadd.f32 0.0, %v163
  %165 = vmatmul.f32.gmra.mxu0 %v66
  %v166 = vpop.f32.mrf.mxu0
  %v167 = vadd.f32 0.0, %v166
  %168 = vmatmul.f32.gmra.mxu0 %v69
  %v169 = vpop.f32.mrf.mxu0
  %v170 = vadd.f32 0.0, %v169
  %171 = vdwg.mxu0
  %172 = vmatpush.msra.mxu0 0.0
  %173 = vmatpush.msra.mxu0 0.0
  %174 = vmatpush.msra.mxu0 0.0
  %175 = vmatpush.msra.mxu0 0.0
  %176 = vmatpush.msra.mxu0 0.0
  %177 = vmatpush.msra.mxu0 0.0
  %178 = vmatpush.msra.mxu0 0.0
  %179 = vmatpush.msra.mxu0 0.0
  %180 = vmatpush.msra.mxu0 0.0
  %181 = vmatpush.msra.mxu0 0.0
  %182 = vmatpush.msra.mxu0 0.0
  %183 = vmatpush.msra.mxu0 0.0
  %184 = vmatpush.msra.mxu0 0.0
  %185 = vmatpush.msra.mxu0 0.0
  %186 = vmatpush.msra.mxu0 0.0
  %187 = vmatpush.msra.mxu0 %v76
  %188 = vmatmul.f32.gmra.mxu0 %v48
  %v189 = vpop.f32.mrf.mxu0
  %v190 = vadd.f32 0.0, %v189
  %191 = vmatmul.f32.gmra.mxu0 %v51
  %v192 = vpop.f32.mrf.mxu0
  %v193 = vadd.f32 0.0, %v192
  %194 = vmatmul.f32.gmra.mxu0 %v54
  %v195 = vpop.f32.mrf.mxu0
  %v196 = vadd.f32 0.0, %v195
  %197 = vmatmul.f32.gmra.mxu0 %v57
  %v198 = vpop.f32.mrf.mxu0
  %v199 = vadd.f32 0.0, %v198
  %200 = vmatmul.f32.gmra.mxu0 %v60
  %v201 = vpop.f32.mrf.mxu0
  %v202 = vadd.f32 0.0, %v201
  %203 = vmatmul.f32.gmra.mxu0 %v63
  %v204 = vpop.f32.mrf.mxu0
  %v205 = vadd.f32 0.0, %v204
  %206 = vmatmul.f32.gmra.mxu0 %v66
  %v207 = vpop.f32.mrf.mxu0
  %v208 = vadd.f32 0.0, %v207
  %209 = vmatmul.f32.gmra.mxu0 %v69
  %v210 = vpop.f32.mrf.mxu0
  %v211 = vadd.f32 0.0, %v210
  %212 = vdwg.mxu0
  %213 = vmatpush.msra.mxu0 0.0
  %214 = vmatpush.msra.mxu0 0.0
  %215 = vmatpush.msra.mxu0 0.0
  %216 = vmatpush.msra.mxu0 0.0
  %217 = vmatpush.msra.mxu0 0.0
  %218 = vmatpush.msra.mxu0 0.0
  %219 = vmatpush.msra.mxu0 0.0
  %220 = vmatpush.msra.mxu0 0.0
  %221 = vmatpush.msra.mxu0 0.0
  %222 = vmatpush.msra.mxu0 0.0
  %223 = vmatpush.msra.mxu0 0.0
  %224 = vmatpush.msra.mxu0 0.0
  %225 = vmatpush.msra.mxu0 0.0
  %226 = vmatpush.msra.mxu0 0.0
  %227 = vmatpush.msra.mxu0 0.0
  %228 = vmatpush.msra.mxu0 %v78
  %229 = vmatmul.f32.gmra.mxu0 %v48
  %v230 = vpop.f32.mrf.mxu0
  %v231 = vadd.f32 0.0, %v230
  %232 = vmatmul.f32.gmra.mxu0 %v51
  %v233 = vpop.f32.mrf.mxu0
  %v234 = vadd.f32 0.0, %v233
  %235 = vmatmul.f32.gmra.mxu0 %v54
  %v236 = vpop.f32.mrf.mxu0
  %v237 = vadd.f32 0.0, %v236
  %238 = vmatmul.f32.gmra.mxu0 %v57
  %v239 = vpop.f32.mrf.mxu0
  %v240 = vadd.f32 0.0, %v239
  %241 = vmatmul.f32.gmra.mxu0 %v60
  %v242 = vpop.f32.mrf.mxu0
  %v243 = vadd.f32 0.0, %v242
  %244 = vmatmul.f32.gmra.mxu0 %v63
  %v245 = vpop.f32.mrf.mxu0
  %v246 = vadd.f32 0.0, %v245
  %247 = vmatmul.f32.gmra.mxu0 %v66
  %v248 = vpop.f32.mrf.mxu0
  %v249 = vadd.f32 0.0, %v248
  %250 = vmatmul.f32.gmra.mxu0 %v69
  %v251 = vpop.f32.mrf.mxu0
  %v252 = vadd.f32 0.0, %v251
  %253 = vdwg.mxu0
  %254 = vmatpush.msra.mxu0 0.0
  %255 = vmatpush.msra.mxu0 0.0
  %256 = vmatpush.msra.mxu0 0.0
  %257 = vmatpush.msra.mxu0 0.0
  %258 = vmatpush.msra.mxu0 0.0
  %259 = vmatpush.msra.mxu0 0.0
  %260 = vmatpush.msra.mxu0 0.0
  %261 = vmatpush.msra.mxu0 0.0
  %262 = vmatpush.msra.mxu0 0.0
  %263 = vmatpush.msra.mxu0 0.0
  %264 = vmatpush.msra.mxu0 0.0
  %265 = vmatpush.msra.mxu0 0.0
  %266 = vmatpush.msra.mxu0 0.0
  %267 = vmatpush.msra.mxu0 0.0
  %268 = vmatpush.msra.mxu0 0.0
  %269 = vmatpush.msra.mxu0 %v80
  %270 = vmatmul.f32.gmra.mxu0 %v48
  %v271 = vpop.f32.mrf.mxu0
  %v272 = vadd.f32 0.0, %v271
  %273 = vmatmul.f32.gmra.mxu0 %v51
  %v274 = vpop.f32.mrf.mxu0
  %v275 = vadd.f32 0.0, %v274
  %276 = vmatmul.f32.gmra.mxu0 %v54
  %v277 = vpop.f32.mrf.mxu0
  %v278 = vadd.f32 0.0, %v277
  %279 = vmatmul.f32.gmra.mxu0 %v57
  %v280 = vpop.f32.mrf.mxu0
  %v281 = vadd.f32 0.0, %v280
  %282 = vmatmul.f32.gmra.mxu0 %v60
  %v283 = vpop.f32.mrf.mxu0
  %v284 = vadd.f32 0.0, %v283
  %285 = vmatmul.f32.gmra.mxu0 %v63
  %v286 = vpop.f32.mrf.mxu0
  %v287 = vadd.f32 0.0, %v286
  %288 = vmatmul.f32.gmra.mxu0 %v66
  %v289 = vpop.f32.mrf.mxu0
  %v290 = vadd.f32 0.0, %v289
  %291 = vmatmul.f32.gmra.mxu0 %v69
  %v292 = vpop.f32.mrf.mxu0
  %v293 = vadd.f32 0.0, %v292
  %294 = vdwg.mxu0
  %295 = vmatpush.msra.mxu0 0.0
  %296 = vmatpush.msra.mxu0 0.0
  %297 = vmatpush.msra.mxu0 0.0
  %298 = vmatpush.msra.mxu0 0.0
  %299 = vmatpush.msra.mxu0 0.0
  %300 = vmatpush.msra.mxu0 0.0
  %301 = vmatpush.msra.mxu0 0.0
  %302 = vmatpush.msra.mxu0 0.0
  %303 = vmatpush.msra.mxu0 0.0
  %304 = vmatpush.msra.mxu0 0.0
  %305 = vmatpush.msra.mxu0 0.0
  %306 = vmatpush.msra.mxu0 0.0
  %307 = vmatpush.msra.mxu0 0.0
  %308 = vmatpush.msra.mxu0 0.0
  %309 = vmatpush.msra.mxu0 0.0
  %310 = vmatpush.msra.mxu0 %v82
  %311 = vmatmul.f32.gmra.mxu0 %v48
  %v312 = vpop.f32.mrf.mxu0
  %v313 = vadd.f32 0.0, %v312
  %314 = vmatmul.f32.gmra.mxu0 %v51
  %v315 = vpop.f32.mrf.mxu0
  %v316 = vadd.f32 0.0, %v315
  %317 = vmatmul.f32.gmra.mxu0 %v54
  %v318 = vpop.f32.mrf.mxu0
  %v319 = vadd.f32 0.0, %v318
  %320 = vmatmul.f32.gmra.mxu0 %v57
  %v321 = vpop.f32.mrf.mxu0
  %v322 = vadd.f32 0.0, %v321
  %323 = vmatmul.f32.gmra.mxu0 %v60
  %v324 = vpop.f32.mrf.mxu0
  %v325 = vadd.f32 0.0, %v324
  %326 = vmatmul.f32.gmra.mxu0 %v63
  %v327 = vpop.f32.mrf.mxu0
  %v328 = vadd.f32 0.0, %v327
  %329 = vmatmul.f32.gmra.mxu0 %v66
  %v330 = vpop.f32.mrf.mxu0
  %v331 = vadd.f32 0.0, %v330
  %332 = vmatmul.f32.gmra.mxu0 %v69
  %v333 = vpop.f32.mrf.mxu0
  %v334 = vadd.f32 0.0, %v333
  %335 = vdwg.mxu0
  %336 = vmatpush.msra.mxu0 0.0
  %337 = vmatpush.msra.mxu0 0.0
  %338 = vmatpush.msra.mxu0 0.0
  %339 = vmatpush.msra.mxu0 0.0
  %340 = vmatpush.msra.mxu0 0.0
  %341 = vmatpush.msra.mxu0 0.0
  %342 = vmatpush.msra.mxu0 0.0
  %343 = vmatpush.msra.mxu0 0.0
  %344 = vmatpush.msra.mxu0 0.0
  %345 = vmatpush.msra.mxu0 0.0
  %346 = vmatpush.msra.mxu0 0.0
  %347 = vmatpush.msra.mxu0 0.0
  %348 = vmatpush.msra.mxu0 0.0
  %349 = vmatpush.msra.mxu0 0.0
  %350 = vmatpush.msra.mxu0 0.0
  %351 = vmatpush.msra.mxu0 %v84
  %352 = vmatmul.f32.gmra.mxu0 %v48
  %v353 = vpop.f32.mrf.mxu0
  %v354 = vadd.f32 0.0, %v353
  %355 = vmatmul.f32.gmra.mxu0 %v51
  %v356 = vpop.f32.mrf.mxu0
  %v357 = vadd.f32 0.0, %v356
  %358 = vmatmul.f32.gmra.mxu0 %v54
  %v359 = vpop.f32.mrf.mxu0
  %v360 = vadd.f32 0.0, %v359
  %361 = vmatmul.f32.gmra.mxu0 %v57
  %v362 = vpop.f32.mrf.mxu0
  %v363 = vadd.f32 0.0, %v362
  %364 = vmatmul.f32.gmra.mxu0 %v60
  %v365 = vpop.f32.mrf.mxu0
  %v366 = vadd.f32 0.0, %v365
  %367 = vmatmul.f32.gmra.mxu0 %v63
  %v368 = vpop.f32.mrf.mxu0
  %v369 = vadd.f32 0.0, %v368
  %370 = vmatmul.f32.gmra.mxu0 %v66
  %v371 = vpop.f32.mrf.mxu0
  %v372 = vadd.f32 0.0, %v371
  %373 = vmatmul.f32.gmra.mxu0 %v69
  %v374 = vpop.f32.mrf.mxu0
  %v375 = vadd.f32 0.0, %v374
  %376 = vdwg.mxu0
  %377 = vmatpush.msra.mxu0 0.0
  %378 = vmatpush.msra.mxu0 0.0
  %379 = vmatpush.msra.mxu0 0.0
  %380 = vmatpush.msra.mxu0 0.0
  %381 = vmatpush.msra.mxu0 0.0
  %382 = vmatpush.msra.mxu0 0.0
  %383 = vmatpush.msra.mxu0 0.0
  %384 = vmatpush.msra.mxu0 0.0
  %385 = vmatpush.msra.mxu0 0.0
  %386 = vmatpush.msra.mxu0 0.0
  %387 = vmatpush.msra.mxu0 0.0
  %388 = vmatpush.msra.mxu0 0.0
  %389 = vmatpush.msra.mxu0 0.0
  %390 = vmatpush.msra.mxu0 0.0
  %391 = vmatpush.msra.mxu0 0.0
  %392 = vmatpush.msra.mxu0 %v86
  %393 = vmatmul.f32.gmra.mxu0 %v48
  %v394 = vpop.f32.mrf.mxu0
  %v395 = vadd.f32 0.0, %v394
  %396 = vmatmul.f32.gmra.mxu0 %v51
  %v397 = vpop.f32.mrf.mxu0
  %v398 = vadd.f32 0.0, %v397
  %399 = vmatmul.f32.gmra.mxu0 %v54
  %v400 = vpop.f32.mrf.mxu0
  %v401 = vadd.f32 0.0, %v400
  %402 = vmatmul.f32.gmra.mxu0 %v57
  %v403 = vpop.f32.mrf.mxu0
  %v404 = vadd.f32 0.0, %v403
  %405 = vmatmul.f32.gmra.mxu0 %v60
  %v406 = vpop.f32.mrf.mxu0
  %v407 = vadd.f32 0.0, %v406
  %408 = vmatmul.f32.gmra.mxu0 %v63
  %v409 = vpop.f32.mrf.mxu0
  %v410 = vadd.f32 0.0, %v409
  %411 = vmatmul.f32.gmra.mxu0 %v66
  %v412 = vpop.f32.mrf.mxu0
  %v413 = vadd.f32 0.0, %v412
  %414 = vmatmul.f32.gmra.mxu0 %v69
  %v415 = vpop.f32.mrf.mxu0
  %v416 = vadd.f32 0.0, %v415
  %417 = vdwg.mxu0
  %418 = vmatpush.msra.mxu0 0.0
  %419 = vmatpush.msra.mxu0 0.0
  %420 = vmatpush.msra.mxu0 0.0
  %421 = vmatpush.msra.mxu0 0.0
  %422 = vmatpush.msra.mxu0 0.0
  %423 = vmatpush.msra.mxu0 0.0
  %424 = vmatpush.msra.mxu0 0.0
  %425 = vmatpush.msra.mxu0 0.0
  %426 = vmatpush.msra.mxu0 0.0
  %427 = vmatpush.msra.mxu0 0.0
  %428 = vmatpush.msra.mxu0 0.0
  %429 = vmatpush.msra.mxu0 0.0
  %430 = vmatpush.msra.mxu0 0.0
  %431 = vmatpush.msra.mxu0 0.0
  %432 = vmatpush.msra.mxu0 0.0
  %433 = vmatpush.msra.mxu0 %v88
  %434 = vmatmul.f32.gmra.mxu0 %v48
  %v435 = vpop.f32.mrf.mxu0
  %v436 = vadd.f32 0.0, %v435
  %437 = vmatmul.f32.gmra.mxu0 %v51
  %v438 = vpop.f32.mrf.mxu0
  %v439 = vadd.f32 0.0, %v438
  %440 = vmatmul.f32.gmra.mxu0 %v54
  %v441 = vpop.f32.mrf.mxu0
  %v442 = vadd.f32 0.0, %v441
  %443 = vmatmul.f32.gmra.mxu0 %v57
  %v444 = vpop.f32.mrf.mxu0
  %v445 = vadd.f32 0.0, %v444
  %446 = vmatmul.f32.gmra.mxu0 %v60
  %v447 = vpop.f32.mrf.mxu0
  %v448 = vadd.f32 0.0, %v447
  %449 = vmatmul.f32.gmra.mxu0 %v63
  %v450 = vpop.f32.mrf.mxu0
  %v451 = vadd.f32 0.0, %v450
  %452 = vmatmul.f32.gmra.mxu0 %v66
  %v453 = vpop.f32.mrf.mxu0
  %v454 = vadd.f32 0.0, %v453
  %455 = vmatmul.f32.gmra.mxu0 %v69
  %v456 = vpop.f32.mrf.mxu0
  %v457 = vadd.f32 0.0, %v456
  %458 = vdwg.mxu0
  %s459 = scalar_lea.vmem %s0, 36
  %v460 = vld [vmem:[%s459] sm:$0xff]
  %v461 = vld [vmem:[%s459 + $0x8] sm:$0xff]
  %v462 = vld [vmem:[%s459 + $0x10] sm:$0xff]
  %v463 = vld [vmem:[%s459 + $0x18] sm:$0xff]
  %v464 = vld [vmem:[%s459 + $0x20] sm:$0xf]
  %470 = vst [vmem:[#allocation1] ss:$2 sm:$0xff] %v460
  %s471 = scalar_lea.vmem [#allocation1], 16
  %472 = vst [vmem:[%s471] ss:$2 sm:$0xff] %v461
  %s473 = scalar_lea.vmem [#allocation1], 32
  %474 = vst [vmem:[%s473] ss:$2 sm:$0xff] %v462
  %s475 = scalar_lea.vmem [#allocation1], 48
  %476 = vst [vmem:[%s475] ss:$2 sm:$0xff] %v463
  %v477 = vld.sshfl [vmem:[#allocation1] sm:$0xff pattern:$0x75316420]
  %v478 = vld.sshfl [vmem:[#allocation1 + $0x8] sm:$0xff pattern:$0x75316420]
  %v479 = vld.sshfl [vmem:[#allocation1 + $0x10] sm:$0xff pattern:$0x75316420]
  %v480 = vld.sshfl [vmem:[#allocation1 + $0x18] sm:$0xff pattern:$0x75316420]
  %v481 = vld.sshfl [vmem:[#allocation1 + $0x20] sm:$0xff pattern:$0x75316420]
  %v482 = vld.sshfl [vmem:[#allocation1 + $0x28] sm:$0xff pattern:$0x75316420]
  %v483 = vld.sshfl [vmem:[#allocation1 + $0x30] sm:$0xff pattern:$0x75316420]
  %v484 = vld.sshfl [vmem:[#allocation1 + $0x38] sm:$0xff pattern:$0x75316420]
  %485 = vst [vmem:[#allocation1] ss:$2 sm:$0xff] %v464
  %v486 = vld.sshfl [vmem:[#allocation1] sm:$0xff pattern:$0x75316420]
  %v487 = vsel %vm71, %v477, 0
  %v489 = vsel %vm71, %v478, 0
  %v491 = vsel %vm71, %v479, 0
  %v493 = vsel %vm71, %v480, 0
  %v495 = vsel %vm71, %v481, 0
  %v497 = vsel %vm71, %v482, 0
  %v499 = vsel %vm71, %v483, 0
  %v501 = vsel %vm71, %v484, 0
  %v503 = vsel %vm71, %v486, 0
  %505 = vmatpush.msra.mxu0 0.0
  %506 = vmatpush.msra.mxu0 0.0
  %507 = vmatpush.msra.mxu0 0.0
  %508 = vmatpush.msra.mxu0 0.0
  %509 = vmatpush.msra.mxu0 0.0
  %510 = vmatpush.msra.mxu0 0.0
  %511 = vmatpush.msra.mxu0 0.0
  %512 = vmatpush.msra.mxu0 0.0
  %513 = vmatpush.msra.mxu0 0.0
  %514 = vmatpush.msra.mxu0 0.0
  %515 = vmatpush.msra.mxu0 0.0
  %516 = vmatpush.msra.mxu0 0.0
  %517 = vmatpush.msra.mxu0 0.0
  %518 = vmatpush.msra.mxu0 0.0
  %519 = vmatpush.msra.mxu0 0.0
  %520 = vmatpush.msra.mxu0 %v487
  %521 = vmatmul.f32.gmra.mxu0 %v48
  %v522 = vpop.f32.mrf.mxu0
  %v523 = vadd.f32 0.0, %v522
  %524 = vmatmul.f32.gmra.mxu0 %v51
  %v525 = vpop.f32.mrf.mxu0
  %v526 = vadd.f32 0.0, %v525
  %527 = vmatmul.f32.gmra.mxu0 %v54
  %v528 = vpop.f32.mrf.mxu0
  %v529 = vadd.f32 0.0, %v528
  %530 = vmatmul.f32.gmra.mxu0 %v57
  %v531 = vpop.f32.mrf.mxu0
  %v532 = vadd.f32 0.0, %v531
  %533 = vmatmul.f32.gmra.mxu0 %v60
  %v534 = vpop.f32.mrf.mxu0
  %v535 = vadd.f32 0.0, %v534
  %536 = vmatmul.f32.gmra.mxu0 %v63
  %v537 = vpop.f32.mrf.mxu0
  %v538 = vadd.f32 0.0, %v537
  %539 = vmatmul.f32.gmra.mxu0 %v66
  %v540 = vpop.f32.mrf.mxu0
  %v541 = vadd.f32 0.0, %v540
  %542 = vmatmul.f32.gmra.mxu0 %v69
  %v543 = vpop.f32.mrf.mxu0
  %v544 = vadd.f32 0.0, %v543
  %545 = vdwg.mxu0
  %546 = vmatpush.msra.mxu0 0.0
  %547 = vmatpush.msra.mxu0 0.0
  %548 = vmatpush.msra.mxu0 0.0
  %549 = vmatpush.msra.mxu0 0.0
  %550 = vmatpush.msra.mxu0 0.0
  %551 = vmatpush.msra.mxu0 0.0
  %552 = vmatpush.msra.mxu0 0.0
  %553 = vmatpush.msra.mxu0 0.0
  %554 = vmatpush.msra.mxu0 0.0
  %555 = vmatpush.msra.mxu0 0.0
  %556 = vmatpush.msra.mxu0 0.0
  %557 = vmatpush.msra.mxu0 0.0
  %558 = vmatpush.msra.mxu0 0.0
  %559 = vmatpush.msra.mxu0 0.0
  %560 = vmatpush.msra.mxu0 0.0
  %561 = vmatpush.msra.mxu0 %v489
  %562 = vmatmul.f32.gmra.mxu0 %v48
  %v563 = vpop.f32.mrf.mxu0
  %v564 = vadd.f32 0.0, %v563
  %565 = vmatmul.f32.gmra.mxu0 %v51
  %v566 = vpop.f32.mrf.mxu0
  %v567 = vadd.f32 0.0, %v566
  %568 = vmatmul.f32.gmra.mxu0 %v54
  %v569 = vpop.f32.mrf.mxu0
  %v570 = vadd.f32 0.0, %v569
  %571 = vmatmul.f32.gmra.mxu0 %v57
  %v572 = vpop.f32.mrf.mxu0
  %v573 = vadd.f32 0.0, %v572
  %574 = vmatmul.f32.gmra.mxu0 %v60
  %v575 = vpop.f32.mrf.mxu0
  %v576 = vadd.f32 0.0, %v575
  %577 = vmatmul.f32.gmra.mxu0 %v63
  %v578 = vpop.f32.mrf.mxu0
  %v579 = vadd.f32 0.0, %v578
  %580 = vmatmul.f32.gmra.mxu0 %v66
  %v581 = vpop.f32.mrf.mxu0
  %v582 = vadd.f32 0.0, %v581
  %583 = vmatmul.f32.gmra.mxu0 %v69
  %v584 = vpop.f32.mrf.mxu0
  %v585 = vadd.f32 0.0, %v584
  %586 = vdwg.mxu0
  %587 = vmatpush.msra.mxu0 0.0
  %588 = vmatpush.msra.mxu0 0.0
  %589 = vmatpush.msra.mxu0 0.0
  %590 = vmatpush.msra.mxu0 0.0
  %591 = vmatpush.msra.mxu0 0.0
  %592 = vmatpush.msra.mxu0 0.0
  %593 = vmatpush.msra.mxu0 0.0
  %594 = vmatpush.msra.mxu0 0.0
  %595 = vmatpush.msra.mxu0 0.0
  %596 = vmatpush.msra.mxu0 0.0
  %597 = vmatpush.msra.mxu0 0.0
  %598 = vmatpush.msra.mxu0 0.0
  %599 = vmatpush.msra.mxu0 0.0
  %600 = vmatpush.msra.mxu0 0.0
  %601 = vmatpush.msra.mxu0 0.0
  %602 = vmatpush.msra.mxu0 %v491
  %603 = vmatmul.f32.gmra.mxu0 %v48
  %v604 = vpop.f32.mrf.mxu0
  %v605 = vadd.f32 0.0, %v604
  %606 = vmatmul.f32.gmra.mxu0 %v51
  %v607 = vpop.f32.mrf.mxu0
  %v608 = vadd.f32 0.0, %v607
  %609 = vmatmul.f32.gmra.mxu0 %v54
  %v610 = vpop.f32.mrf.mxu0
  %v611 = vadd.f32 0.0, %v610
  %612 = vmatmul.f32.gmra.mxu0 %v57
  %v613 = vpop.f32.mrf.mxu0
  %v614 = vadd.f32 0.0, %v613
  %615 = vmatmul.f32.gmra.mxu0 %v60
  %v616 = vpop.f32.mrf.mxu0
  %v617 = vadd.f32 0.0, %v616
  %618 = vmatmul.f32.gmra.mxu0 %v63
  %v619 = vpop.f32.mrf.mxu0
  %v620 = vadd.f32 0.0, %v619
  %621 = vmatmul.f32.gmra.mxu0 %v66
  %v622 = vpop.f32.mrf.mxu0
  %v623 = vadd.f32 0.0, %v622
  %624 = vmatmul.f32.gmra.mxu0 %v69
  %v625 = vpop.f32.mrf.mxu0
  %v626 = vadd.f32 0.0, %v625
  %627 = vdwg.mxu0
  %628 = vmatpush.msra.mxu0 0.0
  %629 = vmatpush.msra.mxu0 0.0
  %630 = vmatpush.msra.mxu0 0.0
  %631 = vmatpush.msra.mxu0 0.0
  %632 = vmatpush.msra.mxu0 0.0
  %633 = vmatpush.msra.mxu0 0.0
  %634 = vmatpush.msra.mxu0 0.0
  %635 = vmatpush.msra.mxu0 0.0
  %636 = vmatpush.msra.mxu0 0.0
  %637 = vmatpush.msra.mxu0 0.0
  %638 = vmatpush.msra.mxu0 0.0
  %639 = vmatpush.msra.mxu0 0.0
  %640 = vmatpush.msra.mxu0 0.0
  %641 = vmatpush.msra.mxu0 0.0
  %642 = vmatpush.msra.mxu0 0.0
  %643 = vmatpush.msra.mxu0 %v493
  %644 = vmatmul.f32.gmra.mxu0 %v48
  %v645 = vpop.f32.mrf.mxu0
  %v646 = vadd.f32 0.0, %v645
  %647 = vmatmul.f32.gmra.mxu0 %v51
  %v648 = vpop.f32.mrf.mxu0
  %v649 = vadd.f32 0.0, %v648
  %650 = vmatmul.f32.gmra.mxu0 %v54
  %v651 = vpop.f32.mrf.mxu0
  %v652 = vadd.f32 0.0, %v651
  %653 = vmatmul.f32.gmra.mxu0 %v57
  %v654 = vpop.f32.mrf.mxu0
  %v655 = vadd.f32 0.0, %v654
  %656 = vmatmul.f32.gmra.mxu0 %v60
  %v657 = vpop.f32.mrf.mxu0
  %v658 = vadd.f32 0.0, %v657
  %659 = vmatmul.f32.gmra.mxu0 %v63
  %v660 = vpop.f32.mrf.mxu0
  %v661 = vadd.f32 0.0, %v660
  %662 = vmatmul.f32.gmra.mxu0 %v66
  %v663 = vpop.f32.mrf.mxu0
  %v664 = vadd.f32 0.0, %v663
  %665 = vmatmul.f32.gmra.mxu0 %v69
  %v666 = vpop.f32.mrf.mxu0
  %v667 = vadd.f32 0.0, %v666
  %668 = vdwg.mxu0
  %669 = vmatpush.msra.mxu0 0.0
  %670 = vmatpush.msra.mxu0 0.0
  %671 = vmatpush.msra.mxu0 0.0
  %672 = vmatpush.msra.mxu0 0.0
  %673 = vmatpush.msra.mxu0 0.0
  %674 = vmatpush.msra.mxu0 0.0
  %675 = vmatpush.msra.mxu0 0.0
  %676 = vmatpush.msra.mxu0 0.0
  %677 = vmatpush.msra.mxu0 0.0
  %678 = vmatpush.msra.mxu0 0.0
  %679 = vmatpush.msra.mxu0 0.0
  %680 = vmatpush.msra.mxu0 0.0
  %681 = vmatpush.msra.mxu0 0.0
  %682 = vmatpush.msra.mxu0 0.0
  %683 = vmatpush.msra.mxu0 0.0
  %684 = vmatpush.msra.mxu0 %v495
  %685 = vmatmul.f32.gmra.mxu0 %v48
  %v686 = vpop.f32.mrf.mxu0
  %v687 = vadd.f32 0.0, %v686
  %688 = vmatmul.f32.gmra.mxu0 %v51
  %v689 = vpop.f32.mrf.mxu0
  %v690 = vadd.f32 0.0, %v689
  %691 = vmatmul.f32.gmra.mxu0 %v54
  %v692 = vpop.f32.mrf.mxu0
  %v693 = vadd.f32 0.0, %v692
  %694 = vmatmul.f32.gmra.mxu0 %v57
  %v695 = vpop.f32.mrf.mxu0
  %v696 = vadd.f32 0.0, %v695
  %697 = vmatmul.f32.gmra.mxu0 %v60
  %v698 = vpop.f32.mrf.mxu0
  %v699 = vadd.f32 0.0, %v698
  %700 = vmatmul.f32.gmra.mxu0 %v63
  %v701 = vpop.f32.mrf.mxu0
  %v702 = vadd.f32 0.0, %v701
  %703 = vmatmul.f32.gmra.mxu0 %v66
  %v704 = vpop.f32.mrf.mxu0
  %v705 = vadd.f32 0.0, %v704
  %706 = vmatmul.f32.gmra.mxu0 %v69
  %v707 = vpop.f32.mrf.mxu0
  %v708 = vadd.f32 0.0, %v707
  %709 = vdwg.mxu0
  %710 = vmatpush.msra.mxu0 0.0
  %711 = vmatpush.msra.mxu0 0.0
  %712 = vmatpush.msra.mxu0 0.0
  %713 = vmatpush.msra.mxu0 0.0
  %714 = vmatpush.msra.mxu0 0.0
  %715 = vmatpush.msra.mxu0 0.0
  %716 = vmatpush.msra.mxu0 0.0
  %717 = vmatpush.msra.mxu0 0.0
  %718 = vmatpush.msra.mxu0 0.0
  %719 = vmatpush.msra.mxu0 0.0
  %720 = vmatpush.msra.mxu0 0.0
  %721 = vmatpush.msra.mxu0 0.0
  %722 = vmatpush.msra.mxu0 0.0
  %723 = vmatpush.msra.mxu0 0.0
  %724 = vmatpush.msra.mxu0 0.0
  %725 = vmatpush.msra.mxu0 %v497
  %726 = vmatmul.f32.gmra.mxu0 %v48
  %v727 = vpop.f32.mrf.mxu0
  %v728 = vadd.f32 0.0, %v727
  %729 = vmatmul.f32.gmra.mxu0 %v51
  %v730 = vpop.f32.mrf.mxu0
  %v731 = vadd.f32 0.0, %v730
  %732 = vmatmul.f32.gmra.mxu0 %v54
  %v733 = vpop.f32.mrf.mxu0
  %v734 = vadd.f32 0.0, %v733
  %735 = vmatmul.f32.gmra.mxu0 %v57
  %v736 = vpop.f32.mrf.mxu0
  %v737 = vadd.f32 0.0, %v736
  %738 = vmatmul.f32.gmra.mxu0 %v60
  %v739 = vpop.f32.mrf.mxu0
  %v740 = vadd.f32 0.0, %v739
  %741 = vmatmul.f32.gmra.mxu0 %v63
  %v742 = vpop.f32.mrf.mxu0
  %v743 = vadd.f32 0.0, %v742
  %744 = vmatmul.f32.gmra.mxu0 %v66
  %v745 = vpop.f32.mrf.mxu0
  %v746 = vadd.f32 0.0, %v745
  %747 = vmatmul.f32.gmra.mxu0 %v69
  %v748 = vpop.f32.mrf.mxu0
  %v749 = vadd.f32 0.0, %v748
  %750 = vdwg.mxu0
  %751 = vmatpush.msra.mxu0 0.0
  %752 = vmatpush.msra.mxu0 0.0
  %753 = vmatpush.msra.mxu0 0.0
  %754 = vmatpush.msra.mxu0 0.0
  %755 = vmatpush.msra.mxu0 0.0
  %756 = vmatpush.msra.mxu0 0.0
  %757 = vmatpush.msra.mxu0 0.0
  %758 = vmatpush.msra.mxu0 0.0
  %759 = vmatpush.msra.mxu0 0.0
  %760 = vmatpush.msra.mxu0 0.0
  %761 = vmatpush.msra.mxu0 0.0
  %762 = vmatpush.msra.mxu0 0.0
  %763 = vmatpush.msra.mxu0 0.0
  %764 = vmatpush.msra.mxu0 0.0
  %765 = vmatpush.msra.mxu0 0.0
  %766 = vmatpush.msra.mxu0 %v499
  %767 = vmatmul.f32.gmra.mxu0 %v48
  %v768 = vpop.f32.mrf.mxu0
  %v769 = vadd.f32 0.0, %v768
  %770 = vmatmul.f32.gmra.mxu0 %v51
  %v771 = vpop.f32.mrf.mxu0
  %v772 = vadd.f32 0.0, %v771
  %773 = vmatmul.f32.gmra.mxu0 %v54
  %v774 = vpop.f32.mrf.mxu0
  %v775 = vadd.f32 0.0, %v774
  %776 = vmatmul.f32.gmra.mxu0 %v57
  %v777 = vpop.f32.mrf.mxu0
  %v778 = vadd.f32 0.0, %v777
  %779 = vmatmul.f32.gmra.mxu0 %v60
  %v780 = vpop.f32.mrf.mxu0
  %v781 = vadd.f32 0.0, %v780
  %782 = vmatmul.f32.gmra.mxu0 %v63
  %v783 = vpop.f32.mrf.mxu0
  %v784 = vadd.f32 0.0, %v783
  %785 = vmatmul.f32.gmra.mxu0 %v66
  %v786 = vpop.f32.mrf.mxu0
  %v787 = vadd.f32 0.0, %v786
  %788 = vmatmul.f32.gmra.mxu0 %v69
  %v789 = vpop.f32.mrf.mxu0
  %v790 = vadd.f32 0.0, %v789
  %791 = vdwg.mxu0
  %792 = vmatpush.msra.mxu0 0.0
  %793 = vmatpush.msra.mxu0 0.0
  %794 = vmatpush.msra.mxu0 0.0
  %795 = vmatpush.msra.mxu0 0.0
  %796 = vmatpush.msra.mxu0 0.0
  %797 = vmatpush.msra.mxu0 0.0
  %798 = vmatpush.msra.mxu0 0.0
  %799 = vmatpush.msra.mxu0 0.0
  %800 = vmatpush.msra.mxu0 0.0
  %801 = vmatpush.msra.mxu0 0.0
  %802 = vmatpush.msra.mxu0 0.0
  %803 = vmatpush.msra.mxu0 0.0
  %804 = vmatpush.msra.mxu0 0.0
  %805 = vmatpush.msra.mxu0 0.0
  %806 = vmatpush.msra.mxu0 0.0
  %807 = vmatpush.msra.mxu0 %v501
  %808 = vmatmul.f32.gmra.mxu0 %v48
  %v809 = vpop.f32.mrf.mxu0
  %v810 = vadd.f32 0.0, %v809
  %811 = vmatmul.f32.gmra.mxu0 %v51
  %v812 = vpop.f32.mrf.mxu0
  %v813 = vadd.f32 0.0, %v812
  %814 = vmatmul.f32.gmra.mxu0 %v54
  %v815 = vpop.f32.mrf.mxu0
  %v816 = vadd.f32 0.0, %v815
  %817 = vmatmul.f32.gmra.mxu0 %v57
  %v818 = vpop.f32.mrf.mxu0
  %v819 = vadd.f32 0.0, %v818
  %820 = vmatmul.f32.gmra.mxu0 %v60
  %v821 = vpop.f32.mrf.mxu0
  %v822 = vadd.f32 0.0, %v821
  %823 = vmatmul.f32.gmra.mxu0 %v63
  %v824 = vpop.f32.mrf.mxu0
  %v825 = vadd.f32 0.0, %v824
  %826 = vmatmul.f32.gmra.mxu0 %v66
  %v827 = vpop.f32.mrf.mxu0
  %v828 = vadd.f32 0.0, %v827
  %829 = vmatmul.f32.gmra.mxu0 %v69
  %v830 = vpop.f32.mrf.mxu0
  %v831 = vadd.f32 0.0, %v830
  %832 = vdwg.mxu0
  %833 = vmatpush.msra.mxu0 0.0
  %834 = vmatpush.msra.mxu0 0.0
  %835 = vmatpush.msra.mxu0 0.0
  %836 = vmatpush.msra.mxu0 0.0
  %837 = vmatpush.msra.mxu0 0.0
  %838 = vmatpush.msra.mxu0 0.0
  %839 = vmatpush.msra.mxu0 0.0
  %840 = vmatpush.msra.mxu0 0.0
  %841 = vmatpush.msra.mxu0 0.0
  %842 = vmatpush.msra.mxu0 0.0
  %843 = vmatpush.msra.mxu0 0.0
  %844 = vmatpush.msra.mxu0 0.0
  %845 = vmatpush.msra.mxu0 0.0
  %846 = vmatpush.msra.mxu0 0.0
  %847 = vmatpush.msra.mxu0 0.0
  %848 = vmatpush.msra.mxu0 %v503
  %849 = vmatmul.f32.gmra.mxu0 %v48
  %v850 = vpop.f32.mrf.mxu0
  %v851 = vadd.f32 0.0, %v850
  %852 = vmatmul.f32.gmra.mxu0 %v51
  %v853 = vpop.f32.mrf.mxu0
  %v854 = vadd.f32 0.0, %v853
  %855 = vmatmul.f32.gmra.mxu0 %v54
  %v856 = vpop.f32.mrf.mxu0
  %v857 = vadd.f32 0.0, %v856
  %858 = vmatmul.f32.gmra.mxu0 %v57
  %v859 = vpop.f32.mrf.mxu0
  %v860 = vadd.f32 0.0, %v859
  %861 = vmatmul.f32.gmra.mxu0 %v60
  %v862 = vpop.f32.mrf.mxu0
  %v863 = vadd.f32 0.0, %v862
  %864 = vmatmul.f32.gmra.mxu0 %v63
  %v865 = vpop.f32.mrf.mxu0
  %v866 = vadd.f32 0.0, %v865
  %867 = vmatmul.f32.gmra.mxu0 %v66
  %v868 = vpop.f32.mrf.mxu0
  %v869 = vadd.f32 0.0, %v868
  %870 = vmatmul.f32.gmra.mxu0 %v69
  %v871 = vpop.f32.mrf.mxu0
  %v872 = vadd.f32 0.0, %v871
  %873 = vdwg.mxu0
  %s874 = scalar_lea.vmem %s0, 72
  %v875 = vld [vmem:[%s874] sm:$0xff]
  %v876 = vld [vmem:[%s874 + $0x8] sm:$0xff]
  %v877 = vld [vmem:[%s874 + $0x10] sm:$0xff]
  %v878 = vld [vmem:[%s874 + $0x18] sm:$0xff]
  %v879 = vld [vmem:[%s874 + $0x20] sm:$0xf]
  %885 = vst [vmem:[#allocation1] ss:$2 sm:$0xff] %v875
  %s886 = scalar_lea.vmem [#allocation1], 16
  %887 = vst [vmem:[%s886] ss:$2 sm:$0xff] %v876
  %s888 = scalar_lea.vmem [#allocation1], 32
  %889 = vst [vmem:[%s888] ss:$2 sm:$0xff] %v877
  %s890 = scalar_lea.vmem [#allocation1], 48
  %891 = vst [vmem:[%s890] ss:$2 sm:$0xff] %v878
  %v892 = vld.sshfl [vmem:[#allocation1] sm:$0xff pattern:$0x75316420]
  %v893 = vld.sshfl [vmem:[#allocation1 + $0x8] sm:$0xff pattern:$0x75316420]
  %v894 = vld.sshfl [vmem:[#allocation1 + $0x10] sm:$0xff pattern:$0x75316420]
  %v895 = vld.sshfl [vmem:[#allocation1 + $0x18] sm:$0xff pattern:$0x75316420]
  %v896 = vld.sshfl [vmem:[#allocation1 + $0x20] sm:$0xff pattern:$0x75316420]
  %v897 = vld.sshfl [vmem:[#allocation1 + $0x28] sm:$0xff pattern:$0x75316420]
  %v898 = vld.sshfl [vmem:[#allocation1 + $0x30] sm:$0xff pattern:$0x75316420]
  %v899 = vld.sshfl [vmem:[#allocation1 + $0x38] sm:$0xff pattern:$0x75316420]
  %900 = vst [vmem:[#allocation1] ss:$2 sm:$0xff] %v879
  %v901 = vld.sshfl [vmem:[#allocation1] sm:$0xff pattern:$0x75316420]
  %v902 = vsel %vm71, %v892, 0
  %v904 = vsel %vm71, %v893, 0
  %v906 = vsel %vm71, %v894, 0
  %v908 = vsel %vm71, %v895, 0
  %v910 = vsel %vm71, %v896, 0
  %v912 = vsel %vm71, %v897, 0
  %v914 = vsel %vm71, %v898, 0
  %v916 = vsel %vm71, %v899, 0
  %v918 = vsel %vm71, %v901, 0
  %920 = vmatpush.msra.mxu0 0.0
  %921 = vmatpush.msra.mxu0 0.0
  %922 = vmatpush.msra.mxu0 0.0
  %923 = vmatpush.msra.mxu0 0.0
  %924 = vmatpush.msra.mxu0 0.0
  %925 = vmatpush.msra.mxu0 0.0
  %926 = vmatpush.msra.mxu0 0.0
  %927 = vmatpush.msra.mxu0 0.0
  %928 = vmatpush.msra.mxu0 0.0
  %929 = vmatpush.msra.mxu0 0.0
  %930 = vmatpush.msra.mxu0 0.0
  %931 = vmatpush.msra.mxu0 0.0
  %932 = vmatpush.msra.mxu0 0.0
  %933 = vmatpush.msra.mxu0 0.0
  %934 = vmatpush.msra.mxu0 0.0
  %935 = vmatpush.msra.mxu0 %v902
  %936 = vmatmul.f32.gmra.mxu0 %v48
  %v937 = vpop.f32.mrf.mxu0
  %v938 = vadd.f32 0.0, %v937
  %939 = vmatmul.f32.gmra.mxu0 %v51
  %v940 = vpop.f32.mrf.mxu0
  %v941 = vadd.f32 0.0, %v940
  %942 = vmatmul.f32.gmra.mxu0 %v54
  %v943 = vpop.f32.mrf.mxu0
  %v944 = vadd.f32 0.0, %v943
  %945 = vmatmul.f32.gmra.mxu0 %v57
  %v946 = vpop.f32.mrf.mxu0
  %v947 = vadd.f32 0.0, %v946
  %948 = vmatmul.f32.gmra.mxu0 %v60
  %v949 = vpop.f32.mrf.mxu0
  %v950 = vadd.f32 0.0, %v949
  %951 = vmatmul.f32.gmra.mxu0 %v63
  %v952 = vpop.f32.mrf.mxu0
  %v953 = vadd.f32 0.0, %v952
  %954 = vmatmul.f32.gmra.mxu0 %v66
  %v955 = vpop.f32.mrf.mxu0
  %v956 = vadd.f32 0.0, %v955
  %957 = vmatmul.f32.gmra.mxu0 %v69
  %v958 = vpop.f32.mrf.mxu0
  %v959 = vadd.f32 0.0, %v958
  %960 = vdwg.mxu0
  %961 = vmatpush.msra.mxu0 0.0
  %962 = vmatpush.msra.mxu0 0.0
  %963 = vmatpush.msra.mxu0 0.0
  %964 = vmatpush.msra.mxu0 0.0
  %965 = vmatpush.msra.mxu0 0.0
  %966 = vmatpush.msra.mxu0 0.0
  %967 = vmatpush.msra.mxu0 0.0
  %968 = vmatpush.msra.mxu0 0.0
  %969 = vmatpush.msra.mxu0 0.0
  %970 = vmatpush.msra.mxu0 0.0
  %971 = vmatpush.msra.mxu0 0.0
  %972 = vmatpush.msra.mxu0 0.0
  %973 = vmatpush.msra.mxu0 0.0
  %974 = vmatpush.msra.mxu0 0.0
  %975 = vmatpush.msra.mxu0 0.0
  %976 = vmatpush.msra.mxu0 %v904
  %977 = vmatmul.f32.gmra.mxu0 %v48
  %v978 = vpop.f32.mrf.mxu0
  %v979 = vadd.f32 0.0, %v978
  %980 = vmatmul.f32.gmra.mxu0 %v51
  %v981 = vpop.f32.mrf.mxu0
  %v982 = vadd.f32 0.0, %v981
  %983 = vmatmul.f32.gmra.mxu0 %v54
  %v984 = vpop.f32.mrf.mxu0
  %v985 = vadd.f32 0.0, %v984
  %986 = vmatmul.f32.gmra.mxu0 %v57
  %v987 = vpop.f32.mrf.mxu0
  %v988 = vadd.f32 0.0, %v987
  %989 = vmatmul.f32.gmra.mxu0 %v60
  %v990 = vpop.f32.mrf.mxu0
  %v991 = vadd.f32 0.0, %v990
  %992 = vmatmul.f32.gmra.mxu0 %v63
  %v993 = vpop.f32.mrf.mxu0
  %v994 = vadd.f32 0.0, %v993
  %995 = vmatmul.f32.gmra.mxu0 %v66
  %v996 = vpop.f32.mrf.mxu0
  %v997 = vadd.f32 0.0, %v996
  %998 = vmatmul.f32.gmra.mxu0 %v69
  %v999 = vpop.f32.mrf.mxu0
  %v1000 = vadd.f32 0.0, %v999
  %1001 = vdwg.mxu0
  %1002 = vmatpush.msra.mxu0 0.0
  %1003 = vmatpush.msra.mxu0 0.0
  %1004 = vmatpush.msra.mxu0 0.0
  %1005 = vmatpush.msra.mxu0 0.0
  %1006 = vmatpush.msra.mxu0 0.0
  %1007 = vmatpush.msra.mxu0 0.0
  %1008 = vmatpush.msra.mxu0 0.0
  %1009 = vmatpush.msra.mxu0 0.0
  %1010 = vmatpush.msra.mxu0 0.0
  %1011 = vmatpush.msra.mxu0 0.0
  %1012 = vmatpush.msra.mxu0 0.0
  %1013 = vmatpush.msra.mxu0 0.0
  %1014 = vmatpush.msra.mxu0 0.0
  %1015 = vmatpush.msra.mxu0 0.0
  %1016 = vmatpush.msra.mxu0 0.0
  %1017 = vmatpush.msra.mxu0 %v906
  %1018 = vmatmul.f32.gmra.mxu0 %v48
  %v1019 = vpop.f32.mrf.mxu0
  %v1020 = vadd.f32 0.0, %v1019
  %1021 = vmatmul.f32.gmra.mxu0 %v51
  %v1022 = vpop.f32.mrf.mxu0
  %v1023 = vadd.f32 0.0, %v1022
  %1024 = vmatmul.f32.gmra.mxu0 %v54
  %v1025 = vpop.f32.mrf.mxu0
  %v1026 = vadd.f32 0.0, %v1025
  %1027 = vmatmul.f32.gmra.mxu0 %v57
  %v1028 = vpop.f32.mrf.mxu0
  %v1029 = vadd.f32 0.0, %v1028
  %1030 = vmatmul.f32.gmra.mxu0 %v60
  %v1031 = vpop.f32.mrf.mxu0
  %v1032 = vadd.f32 0.0, %v1031
  %1033 = vmatmul.f32.gmra.mxu0 %v63
  %v1034 = vpop.f32.mrf.mxu0
  %v1035 = vadd.f32 0.0, %v1034
  %1036 = vmatmul.f32.gmra.mxu0 %v66
  %v1037 = vpop.f32.mrf.mxu0
  %v1038 = vadd.f32 0.0, %v1037
  %1039 = vmatmul.f32.gmra.mxu0 %v69
  %v1040 = vpop.f32.mrf.mxu0
  %v1041 = vadd.f32 0.0, %v1040
  %1042 = vdwg.mxu0
  %1043 = vmatpush.msra.mxu0 0.0
  %1044 = vmatpush.msra.mxu0 0.0
  %1045 = vmatpush.msra.mxu0 0.0
  %1046 = vmatpush.msra.mxu0 0.0
  %1047 = vmatpush.msra.mxu0 0.0
  %1048 = vmatpush.msra.mxu0 0.0
  %1049 = vmatpush.msra.mxu0 0.0
  %1050 = vmatpush.msra.mxu0 0.0
  %1051 = vmatpush.msra.mxu0 0.0
  %1052 = vmatpush.msra.mxu0 0.0
  %1053 = vmatpush.msra.mxu0 0.0
  %1054 = vmatpush.msra.mxu0 0.0
  %1055 = vmatpush.msra.mxu0 0.0
  %1056 = vmatpush.msra.mxu0 0.0
  %1057 = vmatpush.msra.mxu0 0.0
  %1058 = vmatpush.msra.mxu0 %v908
  %1059 = vmatmul.f32.gmra.mxu0 %v48
  %v1060 = vpop.f32.mrf.mxu0
  %v1061 = vadd.f32 0.0, %v1060
  %1062 = vmatmul.f32.gmra.mxu0 %v51
  %v1063 = vpop.f32.mrf.mxu0
  %v1064 = vadd.f32 0.0, %v1063
  %1065 = vmatmul.f32.gmra.mxu0 %v54
  %v1066 = vpop.f32.mrf.mxu0
  %v1067 = vadd.f32 0.0, %v1066
  %1068 = vmatmul.f32.gmra.mxu0 %v57
  %v1069 = vpop.f32.mrf.mxu0
  %v1070 = vadd.f32 0.0, %v1069
  %1071 = vmatmul.f32.gmra.mxu0 %v60
  %v1072 = vpop.f32.mrf.mxu0
  %v1073 = vadd.f32 0.0, %v1072
  %1074 = vmatmul.f32.gmra.mxu0 %v63
  %v1075 = vpop.f32.mrf.mxu0
  %v1076 = vadd.f32 0.0, %v1075
  %1077 = vmatmul.f32.gmra.mxu0 %v66
  %v1078 = vpop.f32.mrf.mxu0
  %v1079 = vadd.f32 0.0, %v1078
  %1080 = vmatmul.f32.gmra.mxu0 %v69
  %v1081 = vpop.f32.mrf.mxu0
  %v1082 = vadd.f32 0.0, %v1081
  %1083 = vdwg.mxu0
  %1084 = vmatpush.msra.mxu0 0.0
  %1085 = vmatpush.msra.mxu0 0.0
  %1086 = vmatpush.msra.mxu0 0.0
  %1087 = vmatpush.msra.mxu0 0.0
  %1088 = vmatpush.msra.mxu0 0.0
  %1089 = vmatpush.msra.mxu0 0.0
  %1090 = vmatpush.msra.mxu0 0.0
  %1091 = vmatpush.msra.mxu0 0.0
  %1092 = vmatpush.msra.mxu0 0.0
  %1093 = vmatpush.msra.mxu0 0.0
  %1094 = vmatpush.msra.mxu0 0.0
  %1095 = vmatpush.msra.mxu0 0.0
  %1096 = vmatpush.msra.mxu0 0.0
  %1097 = vmatpush.msra.mxu0 0.0
  %1098 = vmatpush.msra.mxu0 0.0
  %1099 = vmatpush.msra.mxu0 %v910
  %1100 = vmatmul.f32.gmra.mxu0 %v48
  %v1101 = vpop.f32.mrf.mxu0
  %v1102 = vadd.f32 0.0, %v1101
  %1103 = vmatmul.f32.gmra.mxu0 %v51
  %v1104 = vpop.f32.mrf.mxu0
  %v1105 = vadd.f32 0.0, %v1104
  %1106 = vmatmul.f32.gmra.mxu0 %v54
  %v1107 = vpop.f32.mrf.mxu0
  %v1108 = vadd.f32 0.0, %v1107
  %1109 = vmatmul.f32.gmra.mxu0 %v57
  %v1110 = vpop.f32.mrf.mxu0
  %v1111 = vadd.f32 0.0, %v1110
  %1112 = vmatmul.f32.gmra.mxu0 %v60
  %v1113 = vpop.f32.mrf.mxu0
  %v1114 = vadd.f32 0.0, %v1113
  %1115 = vmatmul.f32.gmra.mxu0 %v63
  %v1116 = vpop.f32.mrf.mxu0
  %v1117 = vadd.f32 0.0, %v1116
  %1118 = vmatmul.f32.gmra.mxu0 %v66
  %v1119 = vpop.f32.mrf.mxu0
  %v1120 = vadd.f32 0.0, %v1119
  %1121 = vmatmul.f32.gmra.mxu0 %v69
  %v1122 = vpop.f32.mrf.mxu0
  %v1123 = vadd.f32 0.0, %v1122
  %1124 = vdwg.mxu0
  %1125 = vmatpush.msra.mxu0 0.0
  %1126 = vmatpush.msra.mxu0 0.0
  %1127 = vmatpush.msra.mxu0 0.0
  %1128 = vmatpush.msra.mxu0 0.0
  %1129 = vmatpush.msra.mxu0 0.0
  %1130 = vmatpush.msra.mxu0 0.0
  %1131 = vmatpush.msra.mxu0 0.0
  %1132 = vmatpush.msra.mxu0 0.0
  %1133 = vmatpush.msra.mxu0 0.0
  %1134 = vmatpush.msra.mxu0 0.0
  %1135 = vmatpush.msra.mxu0 0.0
  %1136 = vmatpush.msra.mxu0 0.0
  %1137 = vmatpush.msra.mxu0 0.0
  %1138 = vmatpush.msra.mxu0 0.0
  %1139 = vmatpush.msra.mxu0 0.0
  %1140 = vmatpush.msra.mxu0 %v912
  %1141 = vmatmul.f32.gmra.mxu0 %v48
  %v1142 = vpop.f32.mrf.mxu0
  %v1143 = vadd.f32 0.0, %v1142
  %1144 = vmatmul.f32.gmra.mxu0 %v51
  %v1145 = vpop.f32.mrf.mxu0
  %v1146 = vadd.f32 0.0, %v1145
  %1147 = vmatmul.f32.gmra.mxu0 %v54
  %v1148 = vpop.f32.mrf.mxu0
  %v1149 = vadd.f32 0.0, %v1148
  %1150 = vmatmul.f32.gmra.mxu0 %v57
  %v1151 = vpop.f32.mrf.mxu0
  %v1152 = vadd.f32 0.0, %v1151
  %1153 = vmatmul.f32.gmra.mxu0 %v60
  %v1154 = vpop.f32.mrf.mxu0
  %v1155 = vadd.f32 0.0, %v1154
  %1156 = vmatmul.f32.gmra.mxu0 %v63
  %v1157 = vpop.f32.mrf.mxu0
  %v1158 = vadd.f32 0.0, %v1157
  %1159 = vmatmul.f32.gmra.mxu0 %v66
  %v1160 = vpop.f32.mrf.mxu0
  %v1161 = vadd.f32 0.0, %v1160
  %1162 = vmatmul.f32.gmra.mxu0 %v69
  %v1163 = vpop.f32.mrf.mxu0
  %v1164 = vadd.f32 0.0, %v1163
  %1165 = vdwg.mxu0
  %1166 = vmatpush.msra.mxu0 0.0
  %1167 = vmatpush.msra.mxu0 0.0
  %1168 = vmatpush.msra.mxu0 0.0
  %1169 = vmatpush.msra.mxu0 0.0
  %1170 = vmatpush.msra.mxu0 0.0
  %1171 = vmatpush.msra.mxu0 0.0
  %1172 = vmatpush.msra.mxu0 0.0
  %1173 = vmatpush.msra.mxu0 0.0
  %1174 = vmatpush.msra.mxu0 0.0
  %1175 = vmatpush.msra.mxu0 0.0
  %1176 = vmatpush.msra.mxu0 0.0
  %1177 = vmatpush.msra.mxu0 0.0
  %1178 = vmatpush.msra.mxu0 0.0
  %1179 = vmatpush.msra.mxu0 0.0
  %1180 = vmatpush.msra.mxu0 0.0
  %1181 = vmatpush.msra.mxu0 %v914
  %1182 = vmatmul.f32.gmra.mxu0 %v48
  %v1183 = vpop.f32.mrf.mxu0
  %v1184 = vadd.f32 0.0, %v1183
  %1185 = vmatmul.f32.gmra.mxu0 %v51
  %v1186 = vpop.f32.mrf.mxu0
  %v1187 = vadd.f32 0.0, %v1186
  %1188 = vmatmul.f32.gmra.mxu0 %v54
  %v1189 = vpop.f32.mrf.mxu0
  %v1190 = vadd.f32 0.0, %v1189
  %1191 = vmatmul.f32.gmra.mxu0 %v57
  %v1192 = vpop.f32.mrf.mxu0
  %v1193 = vadd.f32 0.0, %v1192
  %1194 = vmatmul.f32.gmra.mxu0 %v60
  %v1195 = vpop.f32.mrf.mxu0
  %v1196 = vadd.f32 0.0, %v1195
  %1197 = vmatmul.f32.gmra.mxu0 %v63
  %v1198 = vpop.f32.mrf.mxu0
  %v1199 = vadd.f32 0.0, %v1198
  %1200 = vmatmul.f32.gmra.mxu0 %v66
  %v1201 = vpop.f32.mrf.mxu0
  %v1202 = vadd.f32 0.0, %v1201
  %1203 = vmatmul.f32.gmra.mxu0 %v69
  %v1204 = vpop.f32.mrf.mxu0
  %v1205 = vadd.f32 0.0, %v1204
  %1206 = vdwg.mxu0
  %1207 = vmatpush.msra.mxu0 0.0
  %1208 = vmatpush.msra.mxu0 0.0
  %1209 = vmatpush.msra.mxu0 0.0
  %1210 = vmatpush.msra.mxu0 0.0
  %1211 = vmatpush.msra.mxu0 0.0
  %1212 = vmatpush.msra.mxu0 0.0
  %1213 = vmatpush.msra.mxu0 0.0
  %1214 = vmatpush.msra.mxu0 0.0
  %1215 = vmatpush.msra.mxu0 0.0
  %1216 = vmatpush.msra.mxu0 0.0
  %1217 = vmatpush.msra.mxu0 0.0
  %1218 = vmatpush.msra.mxu0 0.0
  %1219 = vmatpush.msra.mxu0 0.0
  %1220 = vmatpush.msra.mxu0 0.0
  %1221 = vmatpush.msra.mxu0 0.0
  %1222 = vmatpush.msra.mxu0 %v916
  %1223 = vmatmul.f32.gmra.mxu0 %v48
  %v1224 = vpop.f32.mrf.mxu0
  %v1225 = vadd.f32 0.0, %v1224
  %1226 = vmatmul.f32.gmra.mxu0 %v51
  %v1227 = vpop.f32.mrf.mxu0
  %v1228 = vadd.f32 0.0, %v1227
  %1229 = vmatmul.f32.gmra.mxu0 %v54
  %v1230 = vpop.f32.mrf.mxu0
  %v1231 = vadd.f32 0.0, %v1230
  %1232 = vmatmul.f32.gmra.mxu0 %v57
  %v1233 = vpop.f32.mrf.mxu0
  %v1234 = vadd.f32 0.0, %v1233
  %1235 = vmatmul.f32.gmra.mxu0 %v60
  %v1236 = vpop.f32.mrf.mxu0
  %v1237 = vadd.f32 0.0, %v1236
  %1238 = vmatmul.f32.gmra.mxu0 %v63
  %v1239 = vpop.f32.mrf.mxu0
  %v1240 = vadd.f32 0.0, %v1239
  %1241 = vmatmul.f32.gmra.mxu0 %v66
  %v1242 = vpop.f32.mrf.mxu0
  %v1243 = vadd.f32 0.0, %v1242
  %1244 = vmatmul.f32.gmra.mxu0 %v69
  %v1245 = vpop.f32.mrf.mxu0
  %v1246 = vadd.f32 0.0, %v1245
  %1247 = vdwg.mxu0
  %1248 = vmatpush.msra.mxu0 0.0
  %1249 = vmatpush.msra.mxu0 0.0
  %1250 = vmatpush.msra.mxu0 0.0
  %1251 = vmatpush.msra.mxu0 0.0
  %1252 = vmatpush.msra.mxu0 0.0
  %1253 = vmatpush.msra.mxu0 0.0
  %1254 = vmatpush.msra.mxu0 0.0
  %1255 = vmatpush.msra.mxu0 0.0
  %1256 = vmatpush.msra.mxu0 0.0
  %1257 = vmatpush.msra.mxu0 0.0
  %1258 = vmatpush.msra.mxu0 0.0
  %1259 = vmatpush.msra.mxu0 0.0
  %1260 = vmatpush.msra.mxu0 0.0
  %1261 = vmatpush.msra.mxu0 0.0
  %1262 = vmatpush.msra.mxu0 0.0
  %1263 = vmatpush.msra.mxu0 %v918
  %1264 = vmatmul.f32.gmra.mxu0 %v48
  %v1265 = vpop.f32.mrf.mxu0
  %v1266 = vadd.f32 0.0, %v1265
  %1267 = vmatmul.f32.gmra.mxu0 %v51
  %v1268 = vpop.f32.mrf.mxu0
  %v1269 = vadd.f32 0.0, %v1268
  %1270 = vmatmul.f32.gmra.mxu0 %v54
  %v1271 = vpop.f32.mrf.mxu0
  %v1272 = vadd.f32 0.0, %v1271
  %1273 = vmatmul.f32.gmra.mxu0 %v57
  %v1274 = vpop.f32.mrf.mxu0
  %v1275 = vadd.f32 0.0, %v1274
  %1276 = vmatmul.f32.gmra.mxu0 %v60
  %v1277 = vpop.f32.mrf.mxu0
  %v1278 = vadd.f32 0.0, %v1277
  %1279 = vmatmul.f32.gmra.mxu0 %v63
  %v1280 = vpop.f32.mrf.mxu0
  %v1281 = vadd.f32 0.0, %v1280
  %1282 = vmatmul.f32.gmra.mxu0 %v66
  %v1283 = vpop.f32.mrf.mxu0
  %v1284 = vadd.f32 0.0, %v1283
  %1285 = vmatmul.f32.gmra.mxu0 %v69
  %v1286 = vpop.f32.mrf.mxu0
  %v1287 = vadd.f32 0.0, %v1286
  %1288 = vdwg.mxu0
  %s1289 = scalar_lea.vmem %s0, 108
  %v1290 = vld [vmem:[%s1289] sm:$0xff]
  %v1291 = vld [vmem:[%s1289 + $0x8] sm:$0xff]
  %v1292 = vld [vmem:[%s1289 + $0x10] sm:$0xff]
  %v1293 = vld [vmem:[%s1289 + $0x18] sm:$0xff]
  %v1294 = vld [vmem:[%s1289 + $0x20] sm:$0xf]
  %1300 = vst [vmem:[#allocation1] ss:$2 sm:$0xff] %v1290
  %s1301 = scalar_lea.vmem [#allocation1], 16
  %1302 = vst [vmem:[%s1301] ss:$2 sm:$0xff] %v1291
  %s1303 = scalar_lea.vmem [#allocation1], 32
  %1304 = vst [vmem:[%s1303] ss:$2 sm:$0xff] %v1292
  %s1305 = scalar_lea.vmem [#allocation1], 48
  %1306 = vst [vmem:[%s1305] ss:$2 sm:$0xff] %v1293
  %v1307 = vld.sshfl [vmem:[#allocation1] sm:$0xff pattern:$0x75316420]
  %v1308 = vld.sshfl [vmem:[#allocation1 + $0x8] sm:$0xff pattern:$0x75316420]
  %v1309 = vld.sshfl [vmem:[#allocation1 + $0x10] sm:$0xff pattern:$0x75316420]
  %v1310 = vld.sshfl [vmem:[#allocation1 + $0x18] sm:$0xff pattern:$0x75316420]
  %v1311 = vld.sshfl [vmem:[#allocation1 + $0x20] sm:$0xff pattern:$0x75316420]
  %v1312 = vld.sshfl [vmem:[#allocation1 + $0x28] sm:$0xff pattern:$0x75316420]
  %v1313 = vld.sshfl [vmem:[#allocation1 + $0x30] sm:$0xff pattern:$0x75316420]
  %v1314 = vld.sshfl [vmem:[#allocation1 + $0x38] sm:$0xff pattern:$0x75316420]
  %1315 = vst [vmem:[#allocation1] ss:$2 sm:$0xff] %v1294
  %v1316 = vld.sshfl [vmem:[#allocation1] sm:$0xff pattern:$0x75316420]
  %v1317 = vsel %vm71, %v1307, 0
  %v1319 = vsel %vm71, %v1308, 0
  %v1321 = vsel %vm71, %v1309, 0
  %v1323 = vsel %vm71, %v1310, 0
  %v1325 = vsel %vm71, %v1311, 0
  %v1327 = vsel %vm71, %v1312, 0
  %v1329 = vsel %vm71, %v1313, 0
  %v1331 = vsel %vm71, %v1314, 0
  %v1333 = vsel %vm71, %v1316, 0
  %1335 = vmatpush.msra.mxu0 0.0
  %1336 = vmatpush.msra.mxu0 0.0
  %1337 = vmatpush.msra.mxu0 0.0
  %1338 = vmatpush.msra.mxu0 0.0
  %1339 = vmatpush.msra.mxu0 0.0
  %1340 = vmatpush.msra.mxu0 0.0
  %1341 = vmatpush.msra.mxu0 0.0
  %1342 = vmatpush.msra.mxu0 0.0
  %1343 = vmatpush.msra.mxu0 0.0
  %1344 = vmatpush.msra.mxu0 0.0
  %1345 = vmatpush.msra.mxu0 0.0
  %1346 = vmatpush.msra.mxu0 0.0
  %1347 = vmatpush.msra.mxu0 0.0
  %1348 = vmatpush.msra.mxu0 0.0
  %1349 = vmatpush.msra.mxu0 0.0
  %1350 = vmatpush.msra.mxu0 %v1317
  %1351 = vmatmul.f32.gmra.mxu0 %v48
  %v1352 = vpop.f32.mrf.mxu0
  %v1353 = vadd.f32 0.0, %v1352
  %1354 = vmatmul.f32.gmra.mxu0 %v51
  %v1355 = vpop.f32.mrf.mxu0
  %v1356 = vadd.f32 0.0, %v1355
  %1357 = vmatmul.f32.gmra.mxu0 %v54
  %v1358 = vpop.f32.mrf.mxu0
  %v1359 = vadd.f32 0.0, %v1358
  %1360 = vmatmul.f32.gmra.mxu0 %v57
  %v1361 = vpop.f32.mrf.mxu0
  %v1362 = vadd.f32 0.0, %v1361
  %1363 = vmatmul.f32.gmra.mxu0 %v60
  %v1364 = vpop.f32.mrf.mxu0
  %v1365 = vadd.f32 0.0, %v1364
  %1366 = vmatmul.f32.gmra.mxu0 %v63
  %v1367 = vpop.f32.mrf.mxu0
  %v1368 = vadd.f32 0.0, %v1367
  %1369 = vmatmul.f32.gmra.mxu0 %v66
  %v1370 = vpop.f32.mrf.mxu0
  %v1371 = vadd.f32 0.0, %v1370
  %1372 = vmatmul.f32.gmra.mxu0 %v69
  %v1373 = vpop.f32.mrf.mxu0
  %v1374 = vadd.f32 0.0, %v1373
  %1375 = vdwg.mxu0
  %1376 = vmatpush.msra.mxu0 0.0
  %1377 = vmatpush.msra.mxu0 0.0
  %1378 = vmatpush.msra.mxu0 0.0
  %1379 = vmatpush.msra.mxu0 0.0
  %1380 = vmatpush.msra.mxu0 0.0
  %1381 = vmatpush.msra.mxu0 0.0
  %1382 = vmatpush.msra.mxu0 0.0
  %1383 = vmatpush.msra.mxu0 0.0
  %1384 = vmatpush.msra.mxu0 0.0
  %1385 = vmatpush.msra.mxu0 0.0
  %1386 = vmatpush.msra.mxu0 0.0
  %1387 = vmatpush.msra.mxu0 0.0
  %1388 = vmatpush.msra.mxu0 0.0
  %1389 = vmatpush.msra.mxu0 0.0
  %1390 = vmatpush.msra.mxu0 0.0
  %1391 = vmatpush.msra.mxu0 %v1319
  %1392 = vmatmul.f32.gmra.mxu0 %v48
  %v1393 = vpop.f32.mrf.mxu0
  %v1394 = vadd.f32 0.0, %v1393
  %1395 = vmatmul.f32.gmra.mxu0 %v51
  %v1396 = vpop.f32.mrf.mxu0
  %v1397 = vadd.f32 0.0, %v1396
  %1398 = vmatmul.f32.gmra.mxu0 %v54
  %v1399 = vpop.f32.mrf.mxu0
  %v1400 = vadd.f32 0.0, %v1399
  %1401 = vmatmul.f32.gmra.mxu0 %v57
  %v1402 = vpop.f32.mrf.mxu0
  %v1403 = vadd.f32 0.0, %v1402
  %1404 = vmatmul.f32.gmra.mxu0 %v60
  %v1405 = vpop.f32.mrf.mxu0
  %v1406 = vadd.f32 0.0, %v1405
  %1407 = vmatmul.f32.gmra.mxu0 %v63
  %v1408 = vpop.f32.mrf.mxu0
  %v1409 = vadd.f32 0.0, %v1408
  %1410 = vmatmul.f32.gmra.mxu0 %v66
  %v1411 = vpop.f32.mrf.mxu0
  %v1412 = vadd.f32 0.0, %v1411
  %1413 = vmatmul.f32.gmra.mxu0 %v69
  %v1414 = vpop.f32.mrf.mxu0
  %v1415 = vadd.f32 0.0, %v1414
  %1416 = vdwg.mxu0
  %1417 = vmatpush.msra.mxu0 0.0
  %1418 = vmatpush.msra.mxu0 0.0
  %1419 = vmatpush.msra.mxu0 0.0
  %1420 = vmatpush.msra.mxu0 0.0
  %1421 = vmatpush.msra.mxu0 0.0
  %1422 = vmatpush.msra.mxu0 0.0
  %1423 = vmatpush.msra.mxu0 0.0
  %1424 = vmatpush.msra.mxu0 0.0
  %1425 = vmatpush.msra.mxu0 0.0
  %1426 = vmatpush.msra.mxu0 0.0
  %1427 = vmatpush.msra.mxu0 0.0
  %1428 = vmatpush.msra.mxu0 0.0
  %1429 = vmatpush.msra.mxu0 0.0
  %1430 = vmatpush.msra.mxu0 0.0
  %1431 = vmatpush.msra.mxu0 0.0
  %1432 = vmatpush.msra.mxu0 %v1321
  %1433 = vmatmul.f32.gmra.mxu0 %v48
  %v1434 = vpop.f32.mrf.mxu0
  %v1435 = vadd.f32 0.0, %v1434
  %1436 = vmatmul.f32.gmra.mxu0 %v51
  %v1437 = vpop.f32.mrf.mxu0
  %v1438 = vadd.f32 0.0, %v1437
  %1439 = vmatmul.f32.gmra.mxu0 %v54
  %v1440 = vpop.f32.mrf.mxu0
  %v1441 = vadd.f32 0.0, %v1440
  %1442 = vmatmul.f32.gmra.mxu0 %v57
  %v1443 = vpop.f32.mrf.mxu0
  %v1444 = vadd.f32 0.0, %v1443
  %1445 = vmatmul.f32.gmra.mxu0 %v60
  %v1446 = vpop.f32.mrf.mxu0
  %v1447 = vadd.f32 0.0, %v1446
  %1448 = vmatmul.f32.gmra.mxu0 %v63
  %v1449 = vpop.f32.mrf.mxu0
  %v1450 = vadd.f32 0.0, %v1449
  %1451 = vmatmul.f32.gmra.mxu0 %v66
  %v1452 = vpop.f32.mrf.mxu0
  %v1453 = vadd.f32 0.0, %v1452
  %1454 = vmatmul.f32.gmra.mxu0 %v69
  %v1455 = vpop.f32.mrf.mxu0
  %v1456 = vadd.f32 0.0, %v1455
  %1457 = vdwg.mxu0
  %1458 = vmatpush.msra.mxu0 0.0
  %1459 = vmatpush.msra.mxu0 0.0
  %1460 = vmatpush.msra.mxu0 0.0
  %1461 = vmatpush.msra.mxu0 0.0
  %1462 = vmatpush.msra.mxu0 0.0
  %1463 = vmatpush.msra.mxu0 0.0
  %1464 = vmatpush.msra.mxu0 0.0
  %1465 = vmatpush.msra.mxu0 0.0
  %1466 = vmatpush.msra.mxu0 0.0
  %1467 = vmatpush.msra.mxu0 0.0
  %1468 = vmatpush.msra.mxu0 0.0
  %1469 = vmatpush.msra.mxu0 0.0
  %1470 = vmatpush.msra.mxu0 0.0
  %1471 = vmatpush.msra.mxu0 0.0
  %1472 = vmatpush.msra.mxu0 0.0
  %1473 = vmatpush.msra.mxu0 %v1323
  %1474 = vmatmul.f32.gmra.mxu0 %v48
  %v1475 = vpop.f32.mrf.mxu0
  %v1476 = vadd.f32 0.0, %v1475
  %1477 = vmatmul.f32.gmra.mxu0 %v51
  %v1478 = vpop.f32.mrf.mxu0
  %v1479 = vadd.f32 0.0, %v1478
  %1480 = vmatmul.f32.gmra.mxu0 %v54
  %v1481 = vpop.f32.mrf.mxu0
  %v1482 = vadd.f32 0.0, %v1481
  %1483 = vmatmul.f32.gmra.mxu0 %v57
  %v1484 = vpop.f32.mrf.mxu0
  %v1485 = vadd.f32 0.0, %v1484
  %1486 = vmatmul.f32.gmra.mxu0 %v60
  %v1487 = vpop.f32.mrf.mxu0
  %v1488 = vadd.f32 0.0, %v1487
  %1489 = vmatmul.f32.gmra.mxu0 %v63
  %v1490 = vpop.f32.mrf.mxu0
  %v1491 = vadd.f32 0.0, %v1490
  %1492 = vmatmul.f32.gmra.mxu0 %v66
  %v1493 = vpop.f32.mrf.mxu0
  %v1494 = vadd.f32 0.0, %v1493
  %1495 = vmatmul.f32.gmra.mxu0 %v69
  %v1496 = vpop.f32.mrf.mxu0
  %v1497 = vadd.f32 0.0, %v1496
  %1498 = vdwg.mxu0
  %1499 = vmatpush.msra.mxu0 0.0
  %1500 = vmatpush.msra.mxu0 0.0
  %1501 = vmatpush.msra.mxu0 0.0
  %1502 = vmatpush.msra.mxu0 0.0
  %1503 = vmatpush.msra.mxu0 0.0
  %1504 = vmatpush.msra.mxu0 0.0
  %1505 = vmatpush.msra.mxu0 0.0
  %1506 = vmatpush.msra.mxu0 0.0
  %1507 = vmatpush.msra.mxu0 0.0
  %1508 = vmatpush.msra.mxu0 0.0
  %1509 = vmatpush.msra.mxu0 0.0
  %1510 = vmatpush.msra.mxu0 0.0
  %1511 = vmatpush.msra.mxu0 0.0
  %1512 = vmatpush.msra.mxu0 0.0
  %1513 = vmatpush.msra.mxu0 0.0
  %1514 = vmatpush.msra.mxu0 %v1325
  %1515 = vmatmul.f32.gmra.mxu0 %v48
  %v1516 = vpop.f32.mrf.mxu0
  %v1517 = vadd.f32 0.0, %v1516
  %1518 = vmatmul.f32.gmra.mxu0 %v51
  %v1519 = vpop.f32.mrf.mxu0
  %v1520 = vadd.f32 0.0, %v1519
  %1521 = vmatmul.f32.gmra.mxu0 %v54
  %v1522 = vpop.f32.mrf.mxu0
  %v1523 = vadd.f32 0.0, %v1522
  %1524 = vmatmul.f32.gmra.mxu0 %v57
  %v1525 = vpop.f32.mrf.mxu0
  %v1526 = vadd.f32 0.0, %v1525
  %1527 = vmatmul.f32.gmra.mxu0 %v60
  %v1528 = vpop.f32.mrf.mxu0
  %v1529 = vadd.f32 0.0, %v1528
  %1530 = vmatmul.f32.gmra.mxu0 %v63
  %v1531 = vpop.f32.mrf.mxu0
  %v1532 = vadd.f32 0.0, %v1531
  %1533 = vmatmul.f32.gmra.mxu0 %v66
  %v1534 = vpop.f32.mrf.mxu0
  %v1535 = vadd.f32 0.0, %v1534
  %1536 = vmatmul.f32.gmra.mxu0 %v69
  %v1537 = vpop.f32.mrf.mxu0
  %v1538 = vadd.f32 0.0, %v1537
  %1539 = vdwg.mxu0
  %1540 = vmatpush.msra.mxu0 0.0
  %1541 = vmatpush.msra.mxu0 0.0
  %1542 = vmatpush.msra.mxu0 0.0
  %1543 = vmatpush.msra.mxu0 0.0
  %1544 = vmatpush.msra.mxu0 0.0
  %1545 = vmatpush.msra.mxu0 0.0
  %1546 = vmatpush.msra.mxu0 0.0
  %1547 = vmatpush.msra.mxu0 0.0
  %1548 = vmatpush.msra.mxu0 0.0
  %1549 = vmatpush.msra.mxu0 0.0
  %1550 = vmatpush.msra.mxu0 0.0
  %1551 = vmatpush.msra.mxu0 0.0
  %1552 = vmatpush.msra.mxu0 0.0
  %1553 = vmatpush.msra.mxu0 0.0
  %1554 = vmatpush.msra.mxu0 0.0
  %1555 = vmatpush.msra.mxu0 %v1327
  %1556 = vmatmul.f32.gmra.mxu0 %v48
  %v1557 = vpop.f32.mrf.mxu0
  %v1558 = vadd.f32 0.0, %v1557
  %1559 = vmatmul.f32.gmra.mxu0 %v51
  %v1560 = vpop.f32.mrf.mxu0
  %v1561 = vadd.f32 0.0, %v1560
  %1562 = vmatmul.f32.gmra.mxu0 %v54
  %v1563 = vpop.f32.mrf.mxu0
  %v1564 = vadd.f32 0.0, %v1563
  %1565 = vmatmul.f32.gmra.mxu0 %v57
  %v1566 = vpop.f32.mrf.mxu0
  %v1567 = vadd.f32 0.0, %v1566
  %1568 = vmatmul.f32.gmra.mxu0 %v60
  %v1569 = vpop.f32.mrf.mxu0
  %v1570 = vadd.f32 0.0, %v1569
  %1571 = vmatmul.f32.gmra.mxu0 %v63
  %v1572 = vpop.f32.mrf.mxu0
  %v1573 = vadd.f32 0.0, %v1572
  %1574 = vmatmul.f32.gmra.mxu0 %v66
  %v1575 = vpop.f32.mrf.mxu0
  %v1576 = vadd.f32 0.0, %v1575
  %1577 = vmatmul.f32.gmra.mxu0 %v69
  %v1578 = vpop.f32.mrf.mxu0
  %v1579 = vadd.f32 0.0, %v1578
  %1580 = vdwg.mxu0
  %1581 = vmatpush.msra.mxu0 0.0
  %1582 = vmatpush.msra.mxu0 0.0
  %1583 = vmatpush.msra.mxu0 0.0
  %1584 = vmatpush.msra.mxu0 0.0
  %1585 = vmatpush.msra.mxu0 0.0
  %1586 = vmatpush.msra.mxu0 0.0
  %1587 = vmatpush.msra.mxu0 0.0
  %1588 = vmatpush.msra.mxu0 0.0
  %1589 = vmatpush.msra.mxu0 0.0
  %1590 = vmatpush.msra.mxu0 0.0
  %1591 = vmatpush.msra.mxu0 0.0
  %1592 = vmatpush.msra.mxu0 0.0
  %1593 = vmatpush.msra.mxu0 0.0
  %1594 = vmatpush.msra.mxu0 0.0
  %1595 = vmatpush.msra.mxu0 0.0
  %1596 = vmatpush.msra.mxu0 %v1329
  %1597 = vmatmul.f32.gmra.mxu0 %v48
  %v1598 = vpop.f32.mrf.mxu0
  %v1599 = vadd.f32 0.0, %v1598
  %1600 = vmatmul.f32.gmra.mxu0 %v51
  %v1601 = vpop.f32.mrf.mxu0
  %v1602 = vadd.f32 0.0, %v1601
  %1603 = vmatmul.f32.gmra.mxu0 %v54
  %v1604 = vpop.f32.mrf.mxu0
  %v1605 = vadd.f32 0.0, %v1604
  %1606 = vmatmul.f32.gmra.mxu0 %v57
  %v1607 = vpop.f32.mrf.mxu0
  %v1608 = vadd.f32 0.0, %v1607
  %1609 = vmatmul.f32.gmra.mxu0 %v60
  %v1610 = vpop.f32.mrf.mxu0
  %v1611 = vadd.f32 0.0, %v1610
  %1612 = vmatmul.f32.gmra.mxu0 %v63
  %v1613 = vpop.f32.mrf.mxu0
  %v1614 = vadd.f32 0.0, %v1613
  %1615 = vmatmul.f32.gmra.mxu0 %v66
  %v1616 = vpop.f32.mrf.mxu0
  %v1617 = vadd.f32 0.0, %v1616
  %1618 = vmatmul.f32.gmra.mxu0 %v69
  %v1619 = vpop.f32.mrf.mxu0
  %v1620 = vadd.f32 0.0, %v1619
  %1621 = vdwg.mxu0
  %1622 = vmatpush.msra.mxu0 0.0
  %1623 = vmatpush.msra.mxu0 0.0
  %1624 = vmatpush.msra.mxu0 0.0
  %1625 = vmatpush.msra.mxu0 0.0
  %1626 = vmatpush.msra.mxu0 0.0
  %1627 = vmatpush.msra.mxu0 0.0
  %1628 = vmatpush.msra.mxu0 0.0
  %1629 = vmatpush.msra.mxu0 0.0
  %1630 = vmatpush.msra.mxu0 0.0
  %1631 = vmatpush.msra.mxu0 0.0
  %1632 = vmatpush.msra.mxu0 0.0
  %1633 = vmatpush.msra.mxu0 0.0
  %1634 = vmatpush.msra.mxu0 0.0
  %1635 = vmatpush.msra.mxu0 0.0
  %1636 = vmatpush.msra.mxu0 0.0
  %1637 = vmatpush.msra.mxu0 %v1331
  %1638 = vmatmul.f32.gmra.mxu0 %v48
  %v1639 = vpop.f32.mrf.mxu0
  %v1640 = vadd.f32 0.0, %v1639
  %1641 = vmatmul.f32.gmra.mxu0 %v51
  %v1642 = vpop.f32.mrf.mxu0
  %v1643 = vadd.f32 0.0, %v1642
  %1644 = vmatmul.f32.gmra.mxu0 %v54
  %v1645 = vpop.f32.mrf.mxu0
  %v1646 = vadd.f32 0.0, %v1645
  %1647 = vmatmul.f32.gmra.mxu0 %v57
  %v1648 = vpop.f32.mrf.mxu0
  %v1649 = vadd.f32 0.0, %v1648
  %1650 = vmatmul.f32.gmra.mxu0 %v60
  %v1651 = vpop.f32.mrf.mxu0
  %v1652 = vadd.f32 0.0, %v1651
  %1653 = vmatmul.f32.gmra.mxu0 %v63
  %v1654 = vpop.f32.mrf.mxu0
  %v1655 = vadd.f32 0.0, %v1654
  %1656 = vmatmul.f32.gmra.mxu0 %v66
  %v1657 = vpop.f32.mrf.mxu0
  %v1658 = vadd.f32 0.0, %v1657
  %1659 = vmatmul.f32.gmra.mxu0 %v69
  %v1660 = vpop.f32.mrf.mxu0
  %v1661 = vadd.f32 0.0, %v1660
  %1662 = vdwg.mxu0
  %1663 = vmatpush.msra.mxu0 0.0
  %1664 = vmatpush.msra.mxu0 0.0
  %1665 = vmatpush.msra.mxu0 0.0
  %1666 = vmatpush.msra.mxu0 0.0
  %1667 = vmatpush.msra.mxu0 0.0
  %1668 = vmatpush.msra.mxu0 0.0
  %1669 = vmatpush.msra.mxu0 0.0
  %1670 = vmatpush.msra.mxu0 0.0
  %1671 = vmatpush.msra.mxu0 0.0
  %1672 = vmatpush.msra.mxu0 0.0
  %1673 = vmatpush.msra.mxu0 0.0
  %1674 = vmatpush.msra.mxu0 0.0
  %1675 = vmatpush.msra.mxu0 0.0
  %1676 = vmatpush.msra.mxu0 0.0
  %1677 = vmatpush.msra.mxu0 0.0
  %1678 = vmatpush.msra.mxu0 %v1333
  %1679 = vmatmul.f32.gmra.mxu0 %v48
  %v1680 = vpop.f32.mrf.mxu0
  %v1681 = vadd.f32 0.0, %v1680
  %1682 = vmatmul.f32.gmra.mxu0 %v51
  %v1683 = vpop.f32.mrf.mxu0
  %v1684 = vadd.f32 0.0, %v1683
  %1685 = vmatmul.f32.gmra.mxu0 %v54
  %v1686 = vpop.f32.mrf.mxu0
  %v1687 = vadd.f32 0.0, %v1686
  %1688 = vmatmul.f32.gmra.mxu0 %v57
  %v1689 = vpop.f32.mrf.mxu0
  %v1690 = vadd.f32 0.0, %v1689
  %1691 = vmatmul.f32.gmra.mxu0 %v60
  %v1692 = vpop.f32.mrf.mxu0
  %v1693 = vadd.f32 0.0, %v1692
  %1694 = vmatmul.f32.gmra.mxu0 %v63
  %v1695 = vpop.f32.mrf.mxu0
  %v1696 = vadd.f32 0.0, %v1695
  %1697 = vmatmul.f32.gmra.mxu0 %v66
  %v1698 = vpop.f32.mrf.mxu0
  %v1699 = vadd.f32 0.0, %v1698
  %1700 = vmatmul.f32.gmra.mxu0 %v69
  %v1701 = vpop.f32.mrf.mxu0
  %v1702 = vadd.f32 0.0, %v1701
  %1703 = vdwg.mxu0
  %v1704 = vmax.f32 %v108, %v523
  %v1705 = vmax.f32 %v149, %v564
  %v1706 = vmax.f32 %v190, %v605
  %v1707 = vmax.f32 %v231, %v646
  %v1708 = vmax.f32 %v272, %v687
  %v1709 = vmax.f32 %v313, %v728
  %v1710 = vmax.f32 %v354, %v769
  %v1711 = vmax.f32 %v395, %v810
  %v1712 = vmax.f32 %v436, %v851
  %v1713 = vmax.f32 %v111, %v526
  %v1714 = vmax.f32 %v152, %v567
  %v1715 = vmax.f32 %v193, %v608
  %v1716 = vmax.f32 %v234, %v649
  %v1717 = vmax.f32 %v275, %v690
  %v1718 = vmax.f32 %v316, %v731
  %v1719 = vmax.f32 %v357, %v772
  %v1720 = vmax.f32 %v398, %v813
  %v1721 = vmax.f32 %v439, %v854
  %v1722 = vmax.f32 %v114, %v529
  %v1723 = vmax.f32 %v155, %v570
  %v1724 = vmax.f32 %v196, %v611
  %v1725 = vmax.f32 %v237, %v652
  %v1726 = vmax.f32 %v278, %v693
  %v1727 = vmax.f32 %v319, %v734
  %v1728 = vmax.f32 %v360, %v775
  %v1729 = vmax.f32 %v401, %v816
  %v1730 = vmax.f32 %v442, %v857
  %v1731 = vmax.f32 %v117, %v532
  %v1732 = vmax.f32 %v158, %v573
  %v1733 = vmax.f32 %v199, %v614
  %v1734 = vmax.f32 %v240, %v655
  %v1735 = vmax.f32 %v281, %v696
  %v1736 = vmax.f32 %v322, %v737
  %v1737 = vmax.f32 %v363, %v778
  %v1738 = vmax.f32 %v404, %v819
  %v1739 = vmax.f32 %v445, %v860
  %v1740 = vmax.f32 %v120, %v535
  %v1741 = vmax.f32 %v161, %v576
  %v1742 = vmax.f32 %v202, %v617
  %v1743 = vmax.f32 %v243, %v658
  %v1744 = vmax.f32 %v284, %v699
  %v1745 = vmax.f32 %v325, %v740
  %v1746 = vmax.f32 %v366, %v781
  %v1747 = vmax.f32 %v407, %v822
  %v1748 = vmax.f32 %v448, %v863
  %v1749 = vmax.f32 %v123, %v538
  %v1750 = vmax.f32 %v164, %v579
  %v1751 = vmax.f32 %v205, %v620
  %v1752 = vmax.f32 %v246, %v661
  %v1753 = vmax.f32 %v287, %v702
  %v1754 = vmax.f32 %v328, %v743
  %v1755 = vmax.f32 %v369, %v784
  %v1756 = vmax.f32 %v410, %v825
  %v1757 = vmax.f32 %v451, %v866
  %v1758 = vmax.f32 %v126, %v541
  %v1759 = vmax.f32 %v167, %v582
  %v1760 = vmax.f32 %v208, %v623
  %v1761 = vmax.f32 %v249, %v664
  %v1762 = vmax.f32 %v290, %v705
  %v1763 = vmax.f32 %v331, %v746
  %v1764 = vmax.f32 %v372, %v787
  %v1765 = vmax.f32 %v413, %v828
  %v1766 = vmax.f32 %v454, %v869
  %v1767 = vmax.f32 %v129, %v544
  %v1768 = vmax.f32 %v170, %v585
  %v1769 = vmax.f32 %v211, %v626
  %v1770 = vmax.f32 %v252, %v667
  %v1771 = vmax.f32 %v293, %v708
  %v1772 = vmax.f32 %v334, %v749
  %v1773 = vmax.f32 %v375, %v790
  %v1774 = vmax.f32 %v416, %v831
  %v1775 = vmax.f32 %v457, %v872
  %v1776 = vmax.f32 %v938, %v1353
  %v1777 = vmax.f32 %v979, %v1394
  %v1778 = vmax.f32 %v1020, %v1435
  %v1779 = vmax.f32 %v1061, %v1476
  %v1780 = vmax.f32 %v1102, %v1517
  %v1781 = vmax.f32 %v1143, %v1558
  %v1782 = vmax.f32 %v1184, %v1599
  %v1783 = vmax.f32 %v1225, %v1640
  %v1784 = vmax.f32 %v1266, %v1681
  %v1785 = vmax.f32 %v941, %v1356
  %v1786 = vmax.f32 %v982, %v1397
  %v1787 = vmax.f32 %v1023, %v1438
  %v1788 = vmax.f32 %v1064, %v1479
  %v1789 = vmax.f32 %v1105, %v1520
  %v1790 = vmax.f32 %v1146, %v1561
  %v1791 = vmax.f32 %v1187, %v1602
  %v1792 = vmax.f32 %v1228, %v1643
  %v1793 = vmax.f32 %v1269, %v1684
  %v1794 = vmax.f32 %v944, %v1359
  %v1795 = vmax.f32 %v985, %v1400
  %v1796 = vmax.f32 %v1026, %v1441
  %v1797 = vmax.f32 %v1067, %v1482
  %v1798 = vmax.f32 %v1108, %v1523
  %v1799 = vmax.f32 %v1149, %v1564
  %v1800 = vmax.f32 %v1190, %v1605
  %v1801 = vmax.f32 %v1231, %v1646
  %v1802 = vmax.f32 %v1272, %v1687
  %v1803 = vmax.f32 %v947, %v1362
  %v1804 = vmax.f32 %v988, %v1403
  %v1805 = vmax.f32 %v1029, %v1444
  %v1806 = vmax.f32 %v1070, %v1485
  %v1807 = vmax.f32 %v1111, %v1526
  %v1808 = vmax.f32 %v1152, %v1567
  %v1809 = vmax.f32 %v1193, %v1608
  %v1810 = vmax.f32 %v1234, %v1649
  %v1811 = vmax.f32 %v1275, %v1690
  %v1812 = vmax.f32 %v950, %v1365
  %v1813 = vmax.f32 %v991, %v1406
  %v1814 = vmax.f32 %v1032, %v1447
  %v1815 = vmax.f32 %v1073, %v1488
  %v1816 = vmax.f32 %v1114, %v1529
  %v1817 = vmax.f32 %v1155, %v1570
  %v1818 = vmax.f32 %v1196, %v1611
  %v1819 = vmax.f32 %v1237, %v1652
  %v1820 = vmax.f32 %v1278, %v1693
  %v1821 = vmax.f32 %v953, %v1368
  %v1822 = vmax.f32 %v994, %v1409
  %v1823 = vmax.f32 %v1035, %v1450
  %v1824 = vmax.f32 %v1076, %v1491
  %v1825 = vmax.f32 %v1117, %v1532
  %v1826 = vmax.f32 %v1158, %v1573
  %v1827 = vmax.f32 %v1199, %v1614
  %v1828 = vmax.f32 %v1240, %v1655
  %v1829 = vmax.f32 %v1281, %v1696
  %v1830 = vmax.f32 %v956, %v1371
  %v1831 = vmax.f32 %v997, %v1412
  %v1832 = vmax.f32 %v1038, %v1453
  %v1833 = vmax.f32 %v1079, %v1494
  %v1834 = vmax.f32 %v1120, %v1535
  %v1835 = vmax.f32 %v1161, %v1576
  %v1836 = vmax.f32 %v1202, %v1617
  %v1837 = vmax.f32 %v1243, %v1658
  %v1838 = vmax.f32 %v1284, %v1699
  %v1839 = vmax.f32 %v959, %v1374
  %v1840 = vmax.f32 %v1000, %v1415
  %v1841 = vmax.f32 %v1041, %v1456
  %v1842 = vmax.f32 %v1082, %v1497
  %v1843 = vmax.f32 %v1123, %v1538
  %v1844 = vmax.f32 %v1164, %v1579
  %v1845 = vmax.f32 %v1205, %v1620
  %v1846 = vmax.f32 %v1246, %v1661
  %v1847 = vmax.f32 %v1287, %v1702
  %v1848 = vmax.f32 %v1704, %v1776
  %v1849 = vmax.f32 %v1705, %v1777
  %v1850 = vmax.f32 %v1706, %v1778
  %v1851 = vmax.f32 %v1707, %v1779
  %v1852 = vmax.f32 %v1708, %v1780
  %v1853 = vmax.f32 %v1709, %v1781
  %v1854 = vmax.f32 %v1710, %v1782
  %v1855 = vmax.f32 %v1711, %v1783
  %v1856 = vmax.f32 %v1712, %v1784
  %v1857 = vmax.f32 %v1713, %v1785
  %v1858 = vmax.f32 %v1714, %v1786
  %v1859 = vmax.f32 %v1715, %v1787
  %v1860 = vmax.f32 %v1716, %v1788
  %v1861 = vmax.f32 %v1717, %v1789
  %v1862 = vmax.f32 %v1718, %v1790
  %v1863 = vmax.f32 %v1719, %v1791
  %v1864 = vmax.f32 %v1720, %v1792
  %v1865 = vmax.f32 %v1721, %v1793
  %v1866 = vmax.f32 %v1722, %v1794
  %v1867 = vmax.f32 %v1723, %v1795
  %v1868 = vmax.f32 %v1724, %v1796
  %v1869 = vmax.f32 %v1725, %v1797
  %v1870 = vmax.f32 %v1726, %v1798
  %v1871 = vmax.f32 %v1727, %v1799
  %v1872 = vmax.f32 %v1728, %v1800
  %v1873 = vmax.f32 %v1729, %v1801
  %v1874 = vmax.f32 %v1730, %v1802
  %v1875 = vmax.f32 %v1731, %v1803
  %v1876 = vmax.f32 %v1732, %v1804
  %v1877 = vmax.f32 %v1733, %v1805
  %v1878 = vmax.f32 %v1734, %v1806
  %v1879 = vmax.f32 %v1735, %v1807
  %v1880 = vmax.f32 %v1736, %v1808
  %v1881 = vmax.f32 %v1737, %v1809
  %v1882 = vmax.f32 %v1738, %v1810
  %v1883 = vmax.f32 %v1739, %v1811
  %v1884 = vmax.f32 %v1740, %v1812
  %v1885 = vmax.f32 %v1741, %v1813
  %v1886 = vmax.f32 %v1742, %v1814
  %v1887 = vmax.f32 %v1743, %v1815
  %v1888 = vmax.f32 %v1744, %v1816
  %v1889 = vmax.f32 %v1745, %v1817
  %v1890 = vmax.f32 %v1746, %v1818
  %v1891 = vmax.f32 %v1747, %v1819
  %v1892 = vmax.f32 %v1748, %v1820
  %v1893 = vmax.f32 %v1749, %v1821
  %v1894 = vmax.f32 %v1750, %v1822
  %v1895 = vmax.f32 %v1751, %v1823
  %v1896 = vmax.f32 %v1752, %v1824
  %v1897 = vmax.f32 %v1753, %v1825
  %v1898 = vmax.f32 %v1754, %v1826
  %v1899 = vmax.f32 %v1755, %v1827
  %v1900 = vmax.f32 %v1756, %v1828
  %v1901 = vmax.f32 %v1757, %v1829
  %v1902 = vmax.f32 %v1758, %v1830
  %v1903 = vmax.f32 %v1759, %v1831
  %v1904 = vmax.f32 %v1760, %v1832
  %v1905 = vmax.f32 %v1761, %v1833
  %v1906 = vmax.f32 %v1762, %v1834
  %v1907 = vmax.f32 %v1763, %v1835
  %v1908 = vmax.f32 %v1764, %v1836
  %v1909 = vmax.f32 %v1765, %v1837
  %v1910 = vmax.f32 %v1766, %v1838
  %v1911 = vmax.f32 %v1767, %v1839
  %v1912 = vmax.f32 %v1768, %v1840
  %v1913 = vmax.f32 %v1769, %v1841
  %v1914 = vmax.f32 %v1770, %v1842
  %v1915 = vmax.f32 %v1771, %v1843
  %v1916 = vmax.f32 %v1772, %v1844
  %v1917 = vmax.f32 %v1773, %v1845
  %v1918 = vmax.f32 %v1774, %v1846
  %v1919 = vmax.f32 %v1775, %v1847
  %v1920 = vmax.f32 %v1848, 0.0
  %v1921 = vmax.f32 %v1849, 0.0
  %v1922 = vmax.f32 %v1850, 0.0
  %v1923 = vmax.f32 %v1851, 0.0
  %v1924 = vmax.f32 %v1852, 0.0
  %v1925 = vmax.f32 %v1853, 0.0
  %v1926 = vmax.f32 %v1854, 0.0
  %v1927 = vmax.f32 %v1855, 0.0
  %v1928 = vmax.f32 %v1856, 0.0
  %v1929 = vmax.f32 %v1857, 0.0
  %v1930 = vmax.f32 %v1858, 0.0
  %v1931 = vmax.f32 %v1859, 0.0
  %v1932 = vmax.f32 %v1860, 0.0
  %v1933 = vmax.f32 %v1861, 0.0
  %v1934 = vmax.f32 %v1862, 0.0
  %v1935 = vmax.f32 %v1863, 0.0
  %v1936 = vmax.f32 %v1864, 0.0
  %v1937 = vmax.f32 %v1865, 0.0
  %v1938 = vmax.f32 %v1866, 0.0
  %v1939 = vmax.f32 %v1867, 0.0
  %v1940 = vmax.f32 %v1868, 0.0
  %v1941 = vmax.f32 %v1869, 0.0
  %v1942 = vmax.f32 %v1870, 0.0
  %v1943 = vmax.f32 %v1871, 0.0
  %v1944 = vmax.f32 %v1872, 0.0
  %v1945 = vmax.f32 %v1873, 0.0
  %v1946 = vmax.f32 %v1874, 0.0
  %v1947 = vmax.f32 %v1875, 0.0
  %v1948 = vmax.f32 %v1876, 0.0
  %v1949 = vmax.f32 %v1877, 0.0
  %v1950 = vmax.f32 %v1878, 0.0
  %v1951 = vmax.f32 %v1879, 0.0
  %v1952 = vmax.f32 %v1880, 0.0
  %v1953 = vmax.f32 %v1881, 0.0
  %v1954 = vmax.f32 %v1882, 0.0
  %v1955 = vmax.f32 %v1883, 0.0
  %v1956 = vmax.f32 %v1884, 0.0
  %v1957 = vmax.f32 %v1885, 0.0
  %v1958 = vmax.f32 %v1886, 0.0
  %v1959 = vmax.f32 %v1887, 0.0
  %v1960 = vmax.f32 %v1888, 0.0
  %v1961 = vmax.f32 %v1889, 0.0
  %v1962 = vmax.f32 %v1890, 0.0
  %v1963 = vmax.f32 %v1891, 0.0
  %v1964 = vmax.f32 %v1892, 0.0
  %v1965 = vmax.f32 %v1893, 0.0
  %v1966 = vmax.f32 %v1894, 0.0
  %v1967 = vmax.f32 %v1895, 0.0
  %v1968 = vmax.f32 %v1896, 0.0
  %v1969 = vmax.f32 %v1897, 0.0
  %v1970 = vmax.f32 %v1898, 0.0
  %v1971 = vmax.f32 %v1899, 0.0
  %v1972 = vmax.f32 %v1900, 0.0
  %v1973 = vmax.f32 %v1901, 0.0
  %v1974 = vmax.f32 %v1902, 0.0
  %v1975 = vmax.f32 %v1903, 0.0
  %v1976 = vmax.f32 %v1904, 0.0
  %v1977 = vmax.f32 %v1905, 0.0
  %v1978 = vmax.f32 %v1906, 0.0
  %v1979 = vmax.f32 %v1907, 0.0
  %v1980 = vmax.f32 %v1908, 0.0
  %v1981 = vmax.f32 %v1909, 0.0
  %v1982 = vmax.f32 %v1910, 0.0
  %v1983 = vmax.f32 %v1911, 0.0
  %v1984 = vmax.f32 %v1912, 0.0
  %v1985 = vmax.f32 %v1913, 0.0
  %v1986 = vmax.f32 %v1914, 0.0
  %v1987 = vmax.f32 %v1915, 0.0
  %v1988 = vmax.f32 %v1916, 0.0
  %v1989 = vmax.f32 %v1917, 0.0
  %v1990 = vmax.f32 %v1918, 0.0
  %v1991 = vmax.f32 %v1919, 0.0
  %v1992 = vmin.f32 %v1920, 6.0
  %v1993 = vmin.f32 %v1921, 6.0
  %v1994 = vmin.f32 %v1922, 6.0
  %v1995 = vmin.f32 %v1923, 6.0
  %v1996 = vmin.f32 %v1924, 6.0
  %v1997 = vmin.f32 %v1925, 6.0
  %v1998 = vmin.f32 %v1926, 6.0
  %v1999 = vmin.f32 %v1927, 6.0
  %v2000 = vmin.f32 %v1928, 6.0
  %v2001 = vmin.f32 %v1929, 6.0
  %v2002 = vmin.f32 %v1930, 6.0
  %v2003 = vmin.f32 %v1931, 6.0
  %v2004 = vmin.f32 %v1932, 6.0
  %v2005 = vmin.f32 %v1933, 6.0
  %v2006 = vmin.f32 %v1934, 6.0
  %v2007 = vmin.f32 %v1935, 6.0
  %v2008 = vmin.f32 %v1936, 6.0
  %v2009 = vmin.f32 %v1937, 6.0
  %v2010 = vmin.f32 %v1938, 6.0
  %v2011 = vmin.f32 %v1939, 6.0
  %v2012 = vmin.f32 %v1940, 6.0
  %v2013 = vmin.f32 %v1941, 6.0
  %v2014 = vmin.f32 %v1942, 6.0
  %v2015 = vmin.f32 %v1943, 6.0
  %v2016 = vmin.f32 %v1944, 6.0
  %v2017 = vmin.f32 %v1945, 6.0
  %v2018 = vmin.f32 %v1946, 6.0
  %v2019 = vmin.f32 %v1947, 6.0
  %v2020 = vmin.f32 %v1948, 6.0
  %v2021 = vmin.f32 %v1949, 6.0
  %v2022 = vmin.f32 %v1950, 6.0
  %v2023 = vmin.f32 %v1951, 6.0
  %v2024 = vmin.f32 %v1952, 6.0
  %v2025 = vmin.f32 %v1953, 6.0
  %v2026 = vmin.f32 %v1954, 6.0
  %v2027 = vmin.f32 %v1955, 6.0
  %v2028 = vmin.f32 %v1956, 6.0
  %v2029 = vmin.f32 %v1957, 6.0
  %v2030 = vmin.f32 %v1958, 6.0
  %v2031 = vmin.f32 %v1959, 6.0
  %v2032 = vmin.f32 %v1960, 6.0
  %v2033 = vmin.f32 %v1961, 6.0
  %v2034 = vmin.f32 %v1962, 6.0
  %v2035 = vmin.f32 %v1963, 6.0
  %v2036 = vmin.f32 %v1964, 6.0
  %v2037 = vmin.f32 %v1965, 6.0
  %v2038 = vmin.f32 %v1966, 6.0
  %v2039 = vmin.f32 %v1967, 6.0
  %v2040 = vmin.f32 %v1968, 6.0
  %v2041 = vmin.f32 %v1969, 6.0
  %v2042 = vmin.f32 %v1970, 6.0
  %v2043 = vmin.f32 %v1971, 6.0
  %v2044 = vmin.f32 %v1972, 6.0
  %v2045 = vmin.f32 %v1973, 6.0
  %v2046 = vmin.f32 %v1974, 6.0
  %v2047 = vmin.f32 %v1975, 6.0
  %v2048 = vmin.f32 %v1976, 6.0
  %v2049 = vmin.f32 %v1977, 6.0
  %v2050 = vmin.f32 %v1978, 6.0
  %v2051 = vmin.f32 %v1979, 6.0
  %v2052 = vmin.f32 %v1980, 6.0
  %v2053 = vmin.f32 %v1981, 6.0
  %v2054 = vmin.f32 %v1982, 6.0
  %v2055 = vmin.f32 %v1983, 6.0
  %v2056 = vmin.f32 %v1984, 6.0
  %v2057 = vmin.f32 %v1985, 6.0
  %v2058 = vmin.f32 %v1986, 6.0
  %v2059 = vmin.f32 %v1987, 6.0
  %v2060 = vmin.f32 %v1988, 6.0
  %v2061 = vmin.f32 %v1989, 6.0
  %v2062 = vmin.f32 %v1990, 6.0
  %v2063 = vmin.f32 %v1991, 6.0
  %v2064 = vmul.f32 %v1848, %v1992
  %v2065 = vmul.f32 %v1849, %v1993
  %v2066 = vmul.f32 %v1850, %v1994
  %v2067 = vmul.f32 %v1851, %v1995
  %v2068 = vmul.f32 %v1852, %v1996
  %v2069 = vmul.f32 %v1853, %v1997
  %v2070 = vmul.f32 %v1854, %v1998
  %v2071 = vmul.f32 %v1855, %v1999
  %v2072 = vmul.f32 %v1856, %v2000
  %v2073 = vmul.f32 %v1857, %v2001
  %v2074 = vmul.f32 %v1858, %v2002
  %v2075 = vmul.f32 %v1859, %v2003
  %v2076 = vmul.f32 %v1860, %v2004
  %v2077 = vmul.f32 %v1861, %v2005
  %v2078 = vmul.f32 %v1862, %v2006
  %v2079 = vmul.f32 %v1863, %v2007
  %v2080 = vmul.f32 %v1864, %v2008
  %v2081 = vmul.f32 %v1865, %v2009
  %v2082 = vmul.f32 %v1866, %v2010
  %v2083 = vmul.f32 %v1867, %v2011
  %v2084 = vmul.f32 %v1868, %v2012
  %v2085 = vmul.f32 %v1869, %v2013
  %v2086 = vmul.f32 %v1870, %v2014
  %v2087 = vmul.f32 %v1871, %v2015
  %v2088 = vmul.f32 %v1872, %v2016
  %v2089 = vmul.f32 %v1873, %v2017
  %v2090 = vmul.f32 %v1874, %v2018
  %v2091 = vmul.f32 %v1875, %v2019
  %v2092 = vmul.f32 %v1876, %v2020
  %v2093 = vmul.f32 %v1877, %v2021
  %v2094 = vmul.f32 %v1878, %v2022
  %v2095 = vmul.f32 %v1879, %v2023
  %v2096 = vmul.f32 %v1880, %v2024
  %v2097 = vmul.f32 %v1881, %v2025
  %v2098 = vmul.f32 %v1882, %v2026
  %v2099 = vmul.f32 %v1883, %v2027
  %v2100 = vmul.f32 %v1884, %v2028
  %v2101 = vmul.f32 %v1885, %v2029
  %v2102 = vmul.f32 %v1886, %v2030
  %v2103 = vmul.f32 %v1887, %v2031
  %v2104 = vmul.f32 %v1888, %v2032
  %v2105 = vmul.f32 %v1889, %v2033
  %v2106 = vmul.f32 %v1890, %v2034
  %v2107 = vmul.f32 %v1891, %v2035
  %v2108 = vmul.f32 %v1892, %v2036
  %v2109 = vmul.f32 %v1893, %v2037
  %v2110 = vmul.f32 %v1894, %v2038
  %v2111 = vmul.f32 %v1895, %v2039
  %v2112 = vmul.f32 %v1896, %v2040
  %v2113 = vmul.f32 %v1897, %v2041
  %v2114 = vmul.f32 %v1898, %v2042
  %v2115 = vmul.f32 %v1899, %v2043
  %v2116 = vmul.f32 %v1900, %v2044
  %v2117 = vmul.f32 %v1901, %v2045
  %v2118 = vmul.f32 %v1902, %v2046
  %v2119 = vmul.f32 %v1903, %v2047
  %v2120 = vmul.f32 %v1904, %v2048
  %v2121 = vmul.f32 %v1905, %v2049
  %v2122 = vmul.f32 %v1906, %v2050
  %v2123 = vmul.f32 %v1907, %v2051
  %v2124 = vmul.f32 %v1908, %v2052
  %v2125 = vmul.f32 %v1909, %v2053
  %v2126 = vmul.f32 %v1910, %v2054
  %v2127 = vmul.f32 %v1911, %v2055
  %v2128 = vmul.f32 %v1912, %v2056
  %v2129 = vmul.f32 %v1913, %v2057
  %v2130 = vmul.f32 %v1914, %v2058
  %v2131 = vmul.f32 %v1915, %v2059
  %v2132 = vmul.f32 %v1916, %v2060
  %v2133 = vmul.f32 %v1917, %v2061
  %v2134 = vmul.f32 %v1918, %v2062
  %v2135 = vmul.f32 %v1919, %v2063
  %v2136 = vmul.f32 %v2064, 0.16666667
  %v2137 = vmul.f32 %v2065, 0.16666667
  %v2138 = vmul.f32 %v2066, 0.16666667
  %v2139 = vmul.f32 %v2067, 0.16666667
  %v2140 = vmul.f32 %v2068, 0.16666667
  %v2141 = vmul.f32 %v2069, 0.16666667
  %v2142 = vmul.f32 %v2070, 0.16666667
  %v2143 = vmul.f32 %v2071, 0.16666667
  %v2144 = vmul.f32 %v2072, 0.16666667
  %v2145 = vmul.f32 %v2073, 0.16666667
  %v2146 = vmul.f32 %v2074, 0.16666667
  %v2147 = vmul.f32 %v2075, 0.16666667
  %v2148 = vmul.f32 %v2076, 0.16666667
  %v2149 = vmul.f32 %v2077, 0.16666667
  %v2150 = vmul.f32 %v2078, 0.16666667
  %v2151 = vmul.f32 %v2079, 0.16666667
  %v2152 = vmul.f32 %v2080, 0.16666667
  %v2153 = vmul.f32 %v2081, 0.16666667
  %v2154 = vmul.f32 %v2082, 0.16666667
  %v2155 = vmul.f32 %v2083, 0.16666667
  %v2156 = vmul.f32 %v2084, 0.16666667
  %v2157 = vmul.f32 %v2085, 0.16666667
  %v2158 = vmul.f32 %v2086, 0.16666667
  %v2159 = vmul.f32 %v2087, 0.16666667
  %v2160 = vmul.f32 %v2088, 0.16666667
  %v2161 = vmul.f32 %v2089, 0.16666667
  %v2162 = vmul.f32 %v2090, 0.16666667
  %v2163 = vmul.f32 %v2091, 0.16666667
  %v2164 = vmul.f32 %v2092, 0.16666667
  %v2165 = vmul.f32 %v2093, 0.16666667
  %v2166 = vmul.f32 %v2094, 0.16666667
  %v2167 = vmul.f32 %v2095, 0.16666667
  %v2168 = vmul.f32 %v2096, 0.16666667
  %v2169 = vmul.f32 %v2097, 0.16666667
  %v2170 = vmul.f32 %v2098, 0.16666667
  %v2171 = vmul.f32 %v2099, 0.16666667
  %v2172 = vmul.f32 %v2100, 0.16666667
  %v2173 = vmul.f32 %v2101, 0.16666667
  %v2174 = vmul.f32 %v2102, 0.16666667
  %v2175 = vmul.f32 %v2103, 0.16666667
  %v2176 = vmul.f32 %v2104, 0.16666667
  %v2177 = vmul.f32 %v2105, 0.16666667
  %v2178 = vmul.f32 %v2106, 0.16666667
  %v2179 = vmul.f32 %v2107, 0.16666667
  %v2180 = vmul.f32 %v2108, 0.16666667
  %v2181 = vmul.f32 %v2109, 0.16666667
  %v2182 = vmul.f32 %v2110, 0.16666667
  %v2183 = vmul.f32 %v2111, 0.16666667
  %v2184 = vmul.f32 %v2112, 0.16666667
  %v2185 = vmul.f32 %v2113, 0.16666667
  %v2186 = vmul.f32 %v2114, 0.16666667
  %v2187 = vmul.f32 %v2115, 0.16666667
  %v2188 = vmul.f32 %v2116, 0.16666667
  %v2189 = vmul.f32 %v2117, 0.16666667
  %v2190 = vmul.f32 %v2118, 0.16666667
  %v2191 = vmul.f32 %v2119, 0.16666667
  %v2192 = vmul.f32 %v2120, 0.16666667
  %v2193 = vmul.f32 %v2121, 0.16666667
  %v2194 = vmul.f32 %v2122, 0.16666667
  %v2195 = vmul.f32 %v2123, 0.16666667
  %v2196 = vmul.f32 %v2124, 0.16666667
  %v2197 = vmul.f32 %v2125, 0.16666667
  %v2198 = vmul.f32 %v2126, 0.16666667
  %v2199 = vmul.f32 %v2127, 0.16666667
  %v2200 = vmul.f32 %v2128, 0.16666667
  %v2201 = vmul.f32 %v2129, 0.16666667
  %v2202 = vmul.f32 %v2130, 0.16666667
  %v2203 = vmul.f32 %v2131, 0.16666667
  %v2204 = vmul.f32 %v2132, 0.16666667
  %v2205 = vmul.f32 %v2133, 0.16666667
  %v2206 = vmul.f32 %v2134, 0.16666667
  %v2207 = vmul.f32 %v2135, 0.16666667
  %2208 = vst [vmem:[%s2] sm:$0xff] %v2136
  %2209 = vst [vmem:[%s2 + $0x8] sm:$0xff] %v2137
  %2210 = vst [vmem:[%s2 + $0x10] sm:$0xff] %v2138
  %2211 = vst [vmem:[%s2 + $0x18] sm:$0xff] %v2139
  %2212 = vst [vmem:[%s2 + $0x20] sm:$0xff] %v2140
  %2213 = vst [vmem:[%s2 + $0x28] sm:$0xff] %v2141
  %2214 = vst [vmem:[%s2 + $0x30] sm:$0xff] %v2142
  %2215 = vst [vmem:[%s2 + $0x38] sm:$0xff] %v2143
  %2216 = vst [vmem:[%s2 + $0x40] sm:$0xff] %v2144
  %2217 = vst [vmem:[%s2 + $0x48] sm:$0xff] %v2145
  %2218 = vst [vmem:[%s2 + $0x50] sm:$0xff] %v2146
  %2219 = vst [vmem:[%s2 + $0x58] sm:$0xff] %v2147
  %2220 = vst [vmem:[%s2 + $0x60] sm:$0xff] %v2148
  %2221 = vst [vmem:[%s2 + $0x68] sm:$0xff] %v2149
  %2222 = vst [vmem:[%s2 + $0x70] sm:$0xff] %v2150
  %2223 = vst [vmem:[%s2 + $0x78] sm:$0xff] %v2151
  %2224 = vst [vmem:[%s2 + $0x80] sm:$0xff] %v2152
  %2225 = vst [vmem:[%s2 + $0x88] sm:$0xff] %v2153
  %2226 = vst [vmem:[%s2 + $0x90] sm:$0xff] %v2154
  %2227 = vst [vmem:[%s2 + $0x98] sm:$0xff] %v2155
  %2228 = vst [vmem:[%s2 + $0xa0] sm:$0xff] %v2156
  %2229 = vst [vmem:[%s2 + $0xa8] sm:$0xff] %v2157
  %2230 = vst [vmem:[%s2 + $0xb0] sm:$0xff] %v2158
  %2231 = vst [vmem:[%s2 + $0xb8] sm:$0xff] %v2159
  %2232 = vst [vmem:[%s2 + $0xc0] sm:$0xff] %v2160
  %2233 = vst [vmem:[%s2 + $0xc8] sm:$0xff] %v2161
  %2234 = vst [vmem:[%s2 + $0xd0] sm:$0xff] %v2162
  %2235 = vst [vmem:[%s2 + $0xd8] sm:$0xff] %v2163
  %2236 = vst [vmem:[%s2 + $0xe0] sm:$0xff] %v2164
  %2237 = vst [vmem:[%s2 + $0xe8] sm:$0xff] %v2165
  %2238 = vst [vmem:[%s2 + $0xf0] sm:$0xff] %v2166
  %2239 = vst [vmem:[%s2 + $0xf8] sm:$0xff] %v2167
  %2240 = vst [vmem:[%s2 + $0x100] sm:$0xff] %v2168
  %2241 = vst [vmem:[%s2 + $0x108] sm:$0xff] %v2169
  %2242 = vst [vmem:[%s2 + $0x110] sm:$0xff] %v2170
  %2243 = vst [vmem:[%s2 + $0x118] sm:$0xff] %v2171
  %2244 = vst [vmem:[%s2 + $0x120] sm:$0xff] %v2172
  %2245 = vst [vmem:[%s2 + $0x128] sm:$0xff] %v2173
  %2246 = vst [vmem:[%s2 + $0x130] sm:$0xff] %v2174
  %2247 = vst [vmem:[%s2 + $0x138] sm:$0xff] %v2175
  %2248 = vst [vmem:[%s2 + $0x140] sm:$0xff] %v2176
  %2249 = vst [vmem:[%s2 + $0x148] sm:$0xff] %v2177
  %2250 = vst [vmem:[%s2 + $0x150] sm:$0xff] %v2178
  %2251 = vst [vmem:[%s2 + $0x158] sm:$0xff] %v2179
  %2252 = vst [vmem:[%s2 + $0x160] sm:$0xff] %v2180
  %2253 = vst [vmem:[%s2 + $0x168] sm:$0xff] %v2181
  %2254 = vst [vmem:[%s2 + $0x170] sm:$0xff] %v2182
  %2255 = vst [vmem:[%s2 + $0x178] sm:$0xff] %v2183
  %2256 = vst [vmem:[%s2 + $0x180] sm:$0xff] %v2184
  %2257 = vst [vmem:[%s2 + $0x188] sm:$0xff] %v2185
  %2258 = vst [vmem:[%s2 + $0x190] sm:$0xff] %v2186
  %2259 = vst [vmem:[%s2 + $0x198] sm:$0xff] %v2187
  %2260 = vst [vmem:[%s2 + $0x1a0] sm:$0xff] %v2188
  %2261 = vst [vmem:[%s2 + $0x1a8] sm:$0xff] %v2189
  %2262 = vst [vmem:[%s2 + $0x1b0] sm:$0xff] %v2190
  %2263 = vst [vmem:[%s2 + $0x1b8] sm:$0xff] %v2191
  %2264 = vst [vmem:[%s2 + $0x1c0] sm:$0xff] %v2192
  %2265 = vst [vmem:[%s2 + $0x1c8] sm:$0xff] %v2193
  %2266 = vst [vmem:[%s2 + $0x1d0] sm:$0xff] %v2194
  %2267 = vst [vmem:[%s2 + $0x1d8] sm:$0xff] %v2195
  %2268 = vst [vmem:[%s2 + $0x1e0] sm:$0xff] %v2196
  %2269 = vst [vmem:[%s2 + $0x1e8] sm:$0xff] %v2197
  %2270 = vst [vmem:[%s2 + $0x1f0] sm:$0xff] %v2198
  %2271 = vst [vmem:[%s2 + $0x1f8] sm:$0xff] %v2199
  %2272 = vst [vmem:[%s2 + $0x200] sm:$0xff] %v2200
  %2273 = vst [vmem:[%s2 + $0x208] sm:$0xff] %v2201
  %2274 = vst [vmem:[%s2 + $0x210] sm:$0xff] %v2202
  %2275 = vst [vmem:[%s2 + $0x218] sm:$0xff] %v2203
  %2276 = vst [vmem:[%s2 + $0x220] sm:$0xff] %v2204
  %2277 = vst [vmem:[%s2 + $0x228] sm:$0xff] %v2205
  %2278 = vst [vmem:[%s2 + $0x230] sm:$0xff] %v2206
  %2279 = vst [vmem:[%s2 + $0x238] sm:$0xff] %v2207
  // Predicated region
  $region10: #{model_forward.1} parent=0 // pred_check
    _
  $region11: #{model_forward.1} parent=0 // pred_check_branch
    %2281 = sbr.rel (0) target = $region13
  $region12: #{model_forward.1} parent=0 // pred_region
    _
  $region13: #{model_forward.1} parent=0 // pred_fallthru
    _
  // Predicated region
  $region14: #{model_forward.1} parent=0 // pred_check
    _
  $region15: #{model_forward.1} parent=0 // pred_check_branch
    %2283 = sbr.rel (0) target = $region17
  $region16: #{model_forward.1} parent=0 // pred_region
    _
  $region17: #{model_forward.1} parent=0 // pred_fallthru
    _

</llo_original>
